<compile_context>
chip_gen: v5e
topology: v5e:2x2
jax: 0.10.0
libtpu: 0.0.40
codegen_flags: <defaults>
</compile_context>

<pallas_src>
import functools

import jax
import jax.numpy as jnp
import numpy as np
from jax.experimental import pallas as pl
from jax.experimental.pallas import tpu as pltpu


# --------------------------------------------------------------------------
# Fused kernel: target argmax + acceptance + step-0 prep + L-step draft loop
# --------------------------------------------------------------------------
def _fused_worker_kernel(seq_lens_ref, logits_ref, shifted_ids_ref,
                         draft_aligned_ref, hidden_ref, wfc_w1b_ref, emb_w1a_ref,
                         w1b_ref, lm_ref, d2t_ref, acc_prefix_ref, acc_pos_ref,
                         seg_mask_ref, target_ref, next_draft_ref,
                         *, C, G, B, L, T, Tc, R, V):
    i32, f32, bf16 = jnp.int32, jnp.float32, jnp.bfloat16

    # ---- scalar bookkeeping (SMEM): last token index of every context request ----
    last_idx = []
    run = jnp.int32(0)
    for c in range(C):
        run = run + seq_lens_ref[c]
        last_idx.append(run - 1)

    # ---- target-token argmax (fused; first occurrence over the vocab lanes) ----
    # NOTE: `x == mx` first-occurrence argmax is not NaN-safe (matches torch.argmax
    # only for finite logits).
    logits = logits_ref[...]                                              # [R, V] f32
    lane_v_R_f = jax.lax.broadcasted_iota(i32, (R, V), 1).astype(f32)
    mx = jnp.max(logits, axis=-1, keepdims=True)
    tok_col_f = jnp.min(jnp.where(logits == mx, lane_v_R_f, float(V)),
                        axis=-1, keepdims=True)                           # [R, 1] f32
    tok_col_i = tok_col_f.astype(i32)
    target_ref[...] = tok_col_i                                           # one tiny store

    # ---- column -> row form of the target tokens (XLU sublane reduce) ----
    eye_R = (jax.lax.broadcasted_iota(i32, (R, R), 0)
             == jax.lax.broadcasted_iota(i32, (R, R), 1)).astype(f32)
    tok_row_f = jnp.sum(eye_R * tok_col_f, axis=0, keepdims=True)         # [1, R]

    # ---- vectorized acceptance -> step-0 gather positions ----
    # eq over draft positions (draft_aligned holds -1 elsewhere -> never equal).
    eq_row = (tok_row_f == draft_aligned_ref[...]).astype(bf16)           # [1, R]
    # prefix-sum of matches within each gen segment (constant triangular matrix);
    # cum[r] == 1 iff ALL draft positions up to r matched; m = leading-match count.
    prefix_row = jnp.dot(eq_row, acc_prefix_ref[...],
                         preferred_element_type=f32)                      # [1, R]
    cum_row = (prefix_row == acc_pos_ref[...]).astype(f32)                # [1, R]
    m_col = jnp.sum(seg_mask_ref[...] * cum_row, axis=-1, keepdims=True)  # [B, 1]

    row_b = jax.lax.broadcasted_iota(i32, (B, 1), 0)
    gid_gen = Tc + (row_b - C) * (L + 1) + m_col.astype(i32)              # gen rows
    gid_ctx = jnp.zeros((B, 1), i32)
    for c in range(C):                                                    # C selects
        gid_ctx = jnp.where(row_b == c, last_idx[c], gid_ctx)
    gid = jnp.where(row_b < C, gid_ctx, gid_gen)                          # [B, 1]
    sel_BT = (jax.lax.broadcasted_iota(i32, (B, T), 1) == gid).astype(bf16)

    # ---- step-0 drafter input ids (prepare_1st_drafter_inputs), vectorized ----
    # P[t, r] = 1 iff row t of the drafter input takes target token r:
    #   gen rows t >= Tc take target row C + (t - Tc); ctx rows take their accepted
    #   token at last_idx[c].  Everything else keeps the left-shifted input id.
    row_t = jax.lax.broadcasted_iota(i32, (T, R), 0)
    col_r = jax.lax.broadcasted_iota(i32, (T, R), 1)
    P = ((row_t >= Tc) & (col_r == (row_t - (Tc - C)))).astype(f32)
    for c in range(C):                                                    # C selects
        P = jnp.where((col_r == c) & (row_t == last_idx[c]), 1.0, P)
    ids_from_tgt = jnp.sum(P * tok_row_f, axis=-1, keepdims=True)         # [T, 1]
    replace = jnp.sum(P, axis=-1, keepdims=True) > 0.5
    ids0 = jnp.where(replace, ids_from_tgt.astype(i32), shifted_ids_ref[...])

    # ---- hoisted weight loads (used inside the unrolled loop) ----
    emb_w1a = emb_w1a_ref[...]                                            # [V, H] bf16
    w1b = w1b_ref[...]                                                    # [H, H] bf16
    lm = lm_ref[...]                                                      # [H, V] bf16
    d2t_row = d2t_ref[...]                                                # [1, V] i32

    # ---- step-0 draft layer on all T rows (folded matmuls, apply_eagle3_fc fused) --
    lane_v_T = jax.lax.broadcasted_iota(i32, (T, V), 1)
    onehot0 = (lane_v_T == ids0).astype(bf16)                             # [T, V]
    pre = (jnp.dot(onehot0, emb_w1a, preferred_element_type=f32)
           + jnp.dot(hidden_ref[...], wfc_w1b_ref[...], preferred_element_type=f32))
    h_full = pre * jax.nn.sigmoid(pre)                                    # SiLU [T, H]

    # ---- step-0 row gather h_full[gather_ids] via bf16 selection matmul ----
    h = jnp.dot(sel_BT, h_full.astype(bf16), preferred_element_type=f32)  # [B, H]

    # ---- fused L-step draft loop (all state and weights stay on-chip) ----
    lane_v_B = jax.lax.broadcasted_iota(i32, (B, V), 1)
    lane_v_B_f = lane_v_B.astype(f32)
    toks = []
    prev_ids = None
    for i in range(L):
        if i > 0:
            oh = (lane_v_B == prev_ids).astype(bf16)                      # [B, V]
            pre = (jnp.dot(oh, emb_w1a, preferred_element_type=f32)
                   + jnp.dot(h.astype(bf16), w1b, preferred_element_type=f32))
            h = pre * jax.nn.sigmoid(pre)                                 # [B, H]
        # lm_head + first-occurrence argmax over the vocab lanes
        logit = jnp.dot(h.astype(bf16), lm, preferred_element_type=f32)   # [B, V]
        mxb = jnp.max(logit, axis=-1, keepdims=True)
        tok = jnp.min(jnp.where(logit == mxb, lane_v_B_f, float(V)),
                      axis=-1, keepdims=True).astype(i32)                 # [B, 1]
        # draft_decoder: d2t[tok] + tok, kept on the integer path
        d2t_add = jnp.sum(jnp.where(lane_v_B == tok, d2t_row, 0),
                          axis=-1, keepdims=True)                         # [B, 1] i32
        new_ids = tok + d2t_add
        toks.append(new_ids)
        prev_ids = new_ids

    # single lane store of all draft tokens (no per-step width-1 column stores)
    lane_L = jax.lax.broadcasted_iota(i32, (B, L), 1)
    nd = jnp.zeros((B, L), i32)
    for i, t in enumerate(toks):
        nd = jnp.where(lane_L == i, t, nd)
    next_draft_ref[...] = nd


def _fused_call(seq_lens, logits, shifted_ids, draft_aligned, captured_hidden,
                draft_model, acc_prefix, acc_pos, seg_mask, *, C, G, L, Tc):
    B = C + G
    R, V = logits.shape
    T = shifted_ids.shape[0]
    kernel = functools.partial(_fused_worker_kernel, C=C, G=G, B=B, L=L, T=T,
                               Tc=Tc, R=R, V=V)
    smem = pl.BlockSpec(memory_space=pltpu.MemorySpace.SMEM)
    vmem = pl.BlockSpec(memory_space=pltpu.MemorySpace.VMEM)
    return pl.pallas_call(
        kernel,
        out_shape=(jax.ShapeDtypeStruct((R, 1), jnp.int32),   # target tokens
                   jax.ShapeDtypeStruct((B, L), jnp.int32)),  # next draft tokens
        in_specs=[smem] + [vmem] * 12,
        out_specs=(vmem, vmem),
    )(seq_lens, logits, shifted_ids, draft_aligned, captured_hidden,
      draft_model.wfc_w1b, draft_model.emb_w1a, draft_model.w1b,
      draft_model.lm_head, draft_model.d2t_row, acc_prefix, acc_pos, seg_mask)


# --------------------------------------------------------------------------
# Synthetic draft model (deterministic parameters, built in-script)
# --------------------------------------------------------------------------
class SyntheticDraftModel:
    """Parameter container for the EAGLE3 draft model used by the worker.
    # TODO(synk): the real draft model runs a full attention decoder layer with a
    # KV cache (consuming position_ids / attn_metadata); here it is a single
    # embed -> concat(hidden) -> linear -> SiLU step, fused inside the kernel.
    """

    def __init__(self, key, vocab_size, hidden_size):
        k1, k2, k3, k4 = jax.random.split(key, 4)
        emb = 0.02 * jax.random.normal(k1, (vocab_size, hidden_size), jnp.float32)
        w_fc = 0.02 * jax.random.normal(k2, (3 * hidden_size, hidden_size), jnp.float32)
        w1 = 0.02 * jax.random.normal(k3, (2 * hidden_size, hidden_size), jnp.float32)
        w1a, w1b = w1[:hidden_size], w1[hidden_size:]
        lm = 0.02 * jax.random.normal(k4, (hidden_size, vocab_size), jnp.float32)
        # Offline weight folding (perf feedback):
        #   concat([emb(ids), fc(hidden)]) @ w1 == onehot(ids) @ (emb @ w1a)
        #                                          + hidden @ (w_fc @ w1b)   (step 0)
        #   concat([emb(ids), h_prev   ]) @ w1 == onehot(ids) @ (emb @ w1a)
        #                                          + h_prev @ w1b            (steps > 0)
        self.emb_w1a = jnp.dot(emb, w1a).astype(jnp.bfloat16)   # [V, H]
        self.wfc_w1b = jnp.dot(w_fc, w1b).astype(jnp.bfloat16)  # [3H, H]
        self.w1b = w1b.astype(jnp.bfloat16)                     # [H, H]
        self.lm_head = lm.astype(jnp.bfloat16)                  # [H, V]
        # identity draft->target vocab mapping (d2t), kept in int32
        self.d2t_row = jnp.zeros((1, vocab_size), jnp.int32)    # [1, V]


# --------------------------------------------------------------------------
# Eagle3OneModelWorker
# --------------------------------------------------------------------------
class Eagle3OneModelWorker:

    def __init__(self, max_draft_len):
        self.max_draft_len = max_draft_len

    def sample_and_accept_draft_tokens(self, target_tokens, draft_tokens,
                                       num_contexts, num_gens):
        # Tiny integer bookkeeping (a few dozen ints) in XLA, never on the drafter
        # critical path: the kernel computes its own acceptance scalars internally.
        C, G, L = num_contexts, num_gens, self.max_draft_len
        B = C + G
        tgt = target_tokens[:, 0]
        accepted_ctx = jnp.zeros((C, L + 1), jnp.int32).at[:, 0].set(tgt[:C])
        gen_target = tgt[C:].reshape(G, L + 1)
        accepted_tokens = jnp.concatenate([accepted_ctx, gen_target], axis=0)
        eq = (draft_tokens.reshape(G, L) == gen_target[:, :L]).astype(jnp.int32)
        num_accepted = jnp.ones((B,), jnp.int32).at[C:].set(
            1 + jnp.cumprod(eq, axis=1).sum(axis=1))
        return accepted_tokens, num_accepted

    def forward(self, input_ids, position_ids, logits, seq_lens, captured_hidden,
                draft_tokens, num_contexts, num_gens, num_ctx_tokens, draft_model):
        C, G, L, Tc = num_contexts, num_gens, self.max_draft_len, num_ctx_tokens
        B = C + G
        R = C + G * (L + 1)
        T = input_ids.shape[0]
        raw_logits = logits

        # Compile-time constant acceptance matrices (depend only on C/G/L/Tc).
        acc_prefix = np.zeros((R, R), np.float32)   # segmented lower-tri prefix matrix
        acc_pos = np.full((1, R), -1.0, np.float32)  # local position + 1 (else sentinel)
        seg_mask = np.zeros((B, R), np.float32)      # draft positions of each gen request
        for g in range(G):
            base = C + g * (L + 1)
            for p in range(L):
                acc_pos[0, base + p] = p + 1.0
                seg_mask[C + g, base + p] = 1.0
                for p2 in range(p, L):
                    acc_prefix[base + p, base + p2] = 1.0
        acc_prefix = jnp.asarray(acc_prefix, jnp.bfloat16)
        acc_pos = jnp.asarray(acc_pos)
        seg_mask = jnp.asarray(seg_mask)

        # Tiny layout plumbing (XLA): left-shifted ctx ids and draft tokens aligned to
        # target-logit rows (-1 at non-draft positions so equality can never match).
        shifted_ids = jnp.zeros((T,), jnp.int32).at[:Tc - 1].set(
            input_ids[1:Tc])[:, None]                                     # [T, 1]
        didx = (C + jnp.arange(G)[:, None] * (L + 1)
                + jnp.arange(L)[None, :]).reshape(-1)
        draft_aligned = jnp.full((R,), -1.0, jnp.float32).at[didx].set(
            draft_tokens.astype(jnp.float32))[None, :]                    # [1, R]

        # Single fused kernel: target argmax + acceptance + step-0 prep + draft loop.
        # TODO(synk): attn_metadata bookkeeping (seq_lens fill, kv_lens updates,
        # cuda-graph seq-len save/restore, host_request_types) is host-side metadata
        # mutation with no tensor-compute equivalent; position_ids are only consumed
        # by the real attention drafter (RoPE/KV cache) and are unused here.
        target_tokens, next_draft_tokens = _fused_call(
            seq_lens, logits, shifted_ids, draft_aligned, captured_hidden,
            draft_model, acc_prefix, acc_pos, seg_mask, C=C, G=G, L=L, Tc=Tc)

        accepted_tokens, num_accepted_tokens = self.sample_and_accept_draft_tokens(
            target_tokens, draft_tokens, C, G)

        # next_new_tokens assembled in XLA from scalars already computed here.
        bidx = jnp.arange(B)
        next_new0 = accepted_tokens[bidx, num_accepted_tokens - 1][:, None]
        next_new_tokens = jnp.concatenate([next_new0, next_draft_tokens], axis=1)

        return {
            'logits': raw_logits,
            'new_tokens': accepted_tokens,
            'new_tokens_lens': num_accepted_tokens,
            'next_draft_tokens': next_draft_tokens,
            'next_new_tokens': next_new_tokens,
        }


# --------------------------------------------------------------------------
if __name__ == "__main__":
    key = jax.random.PRNGKey(0)

    H = 128                # hidden_size
    V = 256                # vocab_size
    max_draft_len = 3
    num_contexts = 2
    num_gens = 2
    batch_size = num_contexts + num_gens
    ctx_lens = [5, 3]
    num_ctx_tokens = sum(ctx_lens)                                  # 8
    gen_tokens_per_seq = max_draft_len + 1                          # 4
    num_tokens = num_ctx_tokens + num_gens * gen_tokens_per_seq     # 16
    logits_rows = num_contexts + num_gens * (max_draft_len + 1)     # 10

    seq_lens = jnp.array(ctx_lens + [gen_tokens_per_seq] * num_gens, jnp.int32)
    k = jax.random.split(key, 6)

    input_ids = jax.random.randint(k[0], (num_tokens,), 0, V, dtype=jnp.int32)
    position_ids = jnp.concatenate(
        [jnp.arange(l, dtype=jnp.int32) for l in ctx_lens]
        + [jnp.arange(gen_tokens_per_seq, dtype=jnp.int32)] * num_gens)[None, :]
    logits = jax.random.normal(k[1], (logits_rows, V), jnp.float32)
    captured_hidden = jax.random.normal(
        k[2], (num_tokens, 3 * H), jnp.float32).astype(jnp.bfloat16)
    draft_tokens = jax.random.randint(
        k[3], (num_gens * max_draft_len,), 0, V, dtype=jnp.int32)

    draft_model = SyntheticDraftModel(k[4], V, H)
    worker = Eagle3OneModelWorker(max_draft_len)

    fwd = jax.jit(functools.partial(
        worker.forward, num_contexts=num_contexts, num_gens=num_gens,
        num_ctx_tokens=num_ctx_tokens, draft_model=draft_model))
    out = fwd(input_ids, position_ids, logits, seq_lens, captured_hidden,
              draft_tokens)
    out = jax.tree_util.tree_map(jax.block_until_ready, out)

    assert out['new_tokens'].shape == (batch_size, max_draft_len + 1)
    assert out['new_tokens_lens'].shape == (batch_size,)
    assert out['next_draft_tokens'].shape == (batch_size, max_draft_len)
    assert out['next_new_tokens'].shape == (batch_size, max_draft_len + 1)

    # Exact integer cross-checks (fused in-kernel argmax vs XLA argmax; token
    # plumbing vs the accepted-token bookkeeping).
    ref_target = jnp.argmax(logits, axis=-1).astype(jnp.int32)
    ref_gen = ref_target[num_contexts:].reshape(num_gens, max_draft_len + 1)
    np.testing.assert_array_equal(np.asarray(out['new_tokens'][num_contexts:]),
                                  np.asarray(ref_gen))
    np.testing.assert_array_equal(np.asarray(out['new_tokens'][:num_contexts, 0]),
                                  np.asarray(ref_target[:num_contexts]))
    bidx = jnp.arange(batch_size)
    np.testing.assert_array_equal(
        np.asarray(out['next_new_tokens'][:, 0]),
        np.asarray(out['new_tokens'][bidx, out['new_tokens_lens'] - 1]))
    np.testing.assert_array_equal(np.asarray(out['next_new_tokens'][:, 1:]),
                                  np.asarray(out['next_draft_tokens']))
    assert np.all(np.asarray(out['next_draft_tokens']) >= 0)
    assert np.all(np.asarray(out['next_draft_tokens']) < V)

    print("KERNEL_OK")
</pallas_src>

<mosaic_0001>
module attributes {stable_mosaic.version = 11 : i64} {
  func.func @_fused_worker_kernel(%arg0: memref<4xi32, #tpu.memory_space<smem>>, %arg1: memref<10x256xf32, #tpu.memory_space<vmem>>, %arg2: memref<16x1xi32, #tpu.memory_space<vmem>>, %arg3: memref<1x10xf32, #tpu.memory_space<vmem>>, %arg4: memref<16x384xbf16, #tpu.memory_space<vmem>>, %arg5: memref<384x128xbf16, #tpu.memory_space<vmem>>, %arg6: memref<256x128xbf16, #tpu.memory_space<vmem>>, %arg7: memref<128x128xbf16, #tpu.memory_space<vmem>>, %arg8: memref<128x256xbf16, #tpu.memory_space<vmem>>, %arg9: memref<1x256xi32, #tpu.memory_space<vmem>>, %arg10: memref<10x10xbf16, #tpu.memory_space<vmem>>, %arg11: memref<1x10xf32, #tpu.memory_space<vmem>>, %arg12: memref<4x10xf32, #tpu.memory_space<vmem>>, %arg13: memref<10x1xi32, #tpu.memory_space<vmem>>, %arg14: memref<4x3xi32, #tpu.memory_space<vmem>>) attributes {dimension_semantics = [], scalar_prefetch = 0 : i64, scratch_operands = 0 : i64, tpu.core_type = #tpu.core_type<tc>} {
    %c0 = arith.constant 0 : index
    %0 = memref.load %arg0[%c0] : memref<4xi32, #tpu.memory_space<smem>>
    %c0_i32 = arith.constant 0 : i32
    %1 = arith.addi %c0_i32, %0 : i32
    %c1_i32 = arith.constant 1 : i32
    %2 = arith.subi %1, %c1_i32 : i32
    %c1 = arith.constant 1 : index
    %3 = memref.load %arg0[%c1] : memref<4xi32, #tpu.memory_space<smem>>
    %4 = arith.addi %1, %3 : i32
    %c1_i32_0 = arith.constant 1 : i32
    %5 = arith.subi %4, %c1_i32_0 : i32
    %c0_1 = arith.constant 0 : index
    %c0_2 = arith.constant 0 : index
    %6 = vector.load %arg1[%c0_1, %c0_2] : memref<10x256xf32, #tpu.memory_space<vmem>>, vector<10x256xf32>
    %7 = tpu.iota {dimensions = array<i32: 1>} : vector<10x256xi32>
    %8 = arith.sitofp %7 : vector<10x256xi32> to vector<10x256xf32>
    %cst = arith.constant dense<0xFF800000> : vector<10xf32>
    %9 = vector.multi_reduction <maximumf>, %6, %cst [1] : vector<10x256xf32> to vector<10xf32>
    %10 = vector.shape_cast %9 : vector<10xf32> to vector<10x1xf32>
    %11 = vector.broadcast %10 : vector<10x1xf32> to vector<10x256xf32>
    %12 = arith.cmpf oeq, %6, %11 : vector<10x256xf32>
    %cst_3 = arith.constant 2.560000e+02 : f32
    %13 = vector.broadcast %cst_3 : f32 to vector<10x256xf32>
    %14 = arith.select %12, %8, %13 : vector<10x256xi1>, vector<10x256xf32>
    %cst_4 = arith.constant dense<0x7F800000> : vector<10xf32>
    %15 = vector.multi_reduction <minimumf>, %14, %cst_4 [1] : vector<10x256xf32> to vector<10xf32>
    %16 = vector.shape_cast %15 : vector<10xf32> to vector<10x1xf32>
    %17 = arith.fptosi %16 : vector<10x1xf32> to vector<10x1xi32>
    %c0_5 = arith.constant 0 : index
    %c0_6 = arith.constant 0 : index
    %18 = vector.load %arg13[%c0_5, %c0_6] : memref<10x1xi32, #tpu.memory_space<vmem>>, vector<10x1xi32>
    tpu.vector_store %arg13[%c0_5, %c0_6], %17 {strides = array<i32>} : memref<10x1xi32, #tpu.memory_space<vmem>>, vector<10x1xi32>,
    %19 = tpu.iota {dimensions = array<i32: 0>} : vector<10x10xi32>
    %20 = tpu.iota {dimensions = array<i32: 1>} : vector<10x10xi32>
    %21 = arith.cmpi eq, %19, %20 : vector<10x10xi32>
    %22 = arith.extui %21 : vector<10x10xi1> to vector<10x10xi32>
    %23 = arith.sitofp %22 : vector<10x10xi32> to vector<10x10xf32>
    %24 = vector.broadcast %16 : vector<10x1xf32> to vector<10x10xf32>
    %25 = arith.mulf %23, %24 : vector<10x10xf32>
    %cst_7 = arith.constant dense<0.000000e+00> : vector<10xf32>
    %26 = vector.multi_reduction <add>, %25, %cst_7 [0] : vector<10x10xf32> to vector<10xf32>
    %27 = vector.shape_cast %26 : vector<10xf32> to vector<1x10xf32>
    %c0_8 = arith.constant 0 : index
    %c0_9 = arith.constant 0 : index
    %28 = vector.load %arg3[%c0_8, %c0_9] : memref<1x10xf32, #tpu.memory_space<vmem>>, vector<1x10xf32>
    %29 = arith.cmpf oeq, %27, %28 : vector<1x10xf32>
    %30 = arith.extui %29 : vector<1x10xi1> to vector<1x10xi32>
    %31 = arith.sitofp %30 : vector<1x10xi32> to vector<1x10xf32>
    %32 = arith.truncf %31 : vector<1x10xf32> to vector<1x10xbf16>
    %c0_10 = arith.constant 0 : index
    %c0_11 = arith.constant 0 : index
    %33 = vector.load %arg10[%c0_10, %c0_11] : memref<10x10xbf16, #tpu.memory_space<vmem>>, vector<10x10xbf16>
    %cst_12 = arith.constant dense<0.000000e+00> : vector<1x10xf32>
    %34 = tpu.matmul %32, %33, %cst_12 {dimension_numbers = #tpu.dot_dimension_numbers<[1], [0], [0], [1], [0, 0, 1, 1], [], []>} : vector<1x10xbf16>, vector<10x10xbf16>, vector<1x10xf32> -> vector<1x10xf32>
    %c0_13 = arith.constant 0 : index
    %c0_14 = arith.constant 0 : index
    %35 = vector.load %arg11[%c0_13, %c0_14] : memref<1x10xf32, #tpu.memory_space<vmem>>, vector<1x10xf32>
    %36 = arith.cmpf oeq, %34, %35 : vector<1x10xf32>
    %37 = arith.extui %36 : vector<1x10xi1> to vector<1x10xi32>
    %38 = arith.sitofp %37 : vector<1x10xi32> to vector<1x10xf32>
    %c0_15 = arith.constant 0 : index
    %c0_16 = arith.constant 0 : index
    %39 = vector.load %arg12[%c0_15, %c0_16] : memref<4x10xf32, #tpu.memory_space<vmem>>, vector<4x10xf32>
    %40 = vector.broadcast %38 : vector<1x10xf32> to vector<4x10xf32>
    %41 = arith.mulf %39, %40 : vector<4x10xf32>
    %cst_17 = arith.constant dense<0.000000e+00> : vector<4xf32>
    %42 = vector.multi_reduction <add>, %41, %cst_17 [1] : vector<4x10xf32> to vector<4xf32>
    %43 = vector.shape_cast %42 : vector<4xf32> to vector<4x1xf32>
    %44 = tpu.iota {dimensions = array<i32: 0>} : vector<4x1xi32>
    %c2_i32 = arith.constant 2 : i32
    %45 = vector.broadcast %c2_i32 : i32 to vector<4x1xi32>
    %46 = arith.subi %44, %45 : vector<4x1xi32>
    %c4_i32 = arith.constant 4 : i32
    %47 = vector.broadcast %c4_i32 : i32 to vector<4x1xi32>
    %48 = arith.muli %46, %47 : vector<4x1xi32>
    %c8_i32 = arith.constant 8 : i32
    %49 = vector.broadcast %c8_i32 : i32 to vector<4x1xi32>
    %50 = arith.addi %49, %48 : vector<4x1xi32>
    %51 = arith.fptosi %43 : vector<4x1xf32> to vector<4x1xi32>
    %52 = arith.addi %50, %51 : vector<4x1xi32>
    %c0_i32_18 = arith.constant 0 : i32
    %53 = vector.broadcast %c0_i32_18 : i32 to vector<4x1xi32>
    %c0_i32_19 = arith.constant 0 : i32
    %54 = vector.broadcast %c0_i32_19 : i32 to vector<4x1xi32>
    %55 = arith.cmpi eq, %44, %54 : vector<4x1xi32>
    %56 = vector.broadcast %2 : i32 to vector<4x1xi32>
    %57 = arith.select %55, %56, %53 : vector<4x1xi1>, vector<4x1xi32>
    %c1_i32_20 = arith.constant 1 : i32
    %58 = vector.broadcast %c1_i32_20 : i32 to vector<4x1xi32>
    %59 = arith.cmpi eq, %44, %58 : vector<4x1xi32>
    %60 = vector.broadcast %5 : i32 to vector<4x1xi32>
    %61 = arith.select %59, %60, %57 : vector<4x1xi1>, vector<4x1xi32>
    %c2_i32_21 = arith.constant 2 : i32
    %62 = vector.broadcast %c2_i32_21 : i32 to vector<4x1xi32>
    %63 = arith.cmpi slt, %44, %62 : vector<4x1xi32>
    %64 = arith.select %63, %61, %52 : vector<4x1xi1>, vector<4x1xi32>
    %65 = tpu.iota {dimensions = array<i32: 1>} : vector<4x16xi32>
    %66 = vector.broadcast %64 : vector<4x1xi32> to vector<4x16xi32>
    %67 = arith.cmpi eq, %65, %66 : vector<4x16xi32>
    %68 = arith.extui %67 : vector<4x16xi1> to vector<4x16xi32>
    %69 = arith.sitofp %68 : vector<4x16xi32> to vector<4x16xf32>
    %70 = arith.truncf %69 : vector<4x16xf32> to vector<4x16xbf16>
    %71 = tpu.iota {dimensions = array<i32: 0>} : vector<16x10xi32>
    %72 = tpu.iota {dimensions = array<i32: 1>} : vector<16x10xi32>
    %c8_i32_22 = arith.constant 8 : i32
    %73 = vector.broadcast %c8_i32_22 : i32 to vector<16x10xi32>
    %74 = arith.cmpi sge, %71, %73 : vector<16x10xi32>
    %c6_i32 = arith.constant 6 : i32
    %75 = vector.broadcast %c6_i32 : i32 to vector<16x10xi32>
    %76 = arith.subi %71, %75 : vector<16x10xi32>
    %77 = arith.cmpi eq, %72, %76 : vector<16x10xi32>
    %78 = arith.andi %74, %77 : vector<16x10xi1>
    %79 = arith.extui %78 : vector<16x10xi1> to vector<16x10xi32>
    %80 = arith.sitofp %79 : vector<16x10xi32> to vector<16x10xf32>
    %c0_i32_23 = arith.constant 0 : i32
    %81 = vector.broadcast %c0_i32_23 : i32 to vector<16x10xi32>
    %82 = arith.cmpi eq, %72, %81 : vector<16x10xi32>
    %83 = vector.broadcast %2 : i32 to vector<16x10xi32>
    %84 = arith.cmpi eq, %71, %83 : vector<16x10xi32>
    %85 = arith.andi %82, %84 : vector<16x10xi1>
    %cst_24 = arith.constant 1.000000e+00 : f32
    %86 = vector.broadcast %cst_24 : f32 to vector<16x10xf32>
    %87 = arith.select %85, %86, %80 : vector<16x10xi1>, vector<16x10xf32>
    %c1_i32_25 = arith.constant 1 : i32
    %88 = vector.broadcast %c1_i32_25 : i32 to vector<16x10xi32>
    %89 = arith.cmpi eq, %72, %88 : vector<16x10xi32>
    %90 = vector.broadcast %5 : i32 to vector<16x10xi32>
    %91 = arith.cmpi eq, %71, %90 : vector<16x10xi32>
    %92 = arith.andi %89, %91 : vector<16x10xi1>
    %cst_26 = arith.constant 1.000000e+00 : f32
    %93 = vector.broadcast %cst_26 : f32 to vector<16x10xf32>
    %94 = arith.select %92, %93, %87 : vector<16x10xi1>, vector<16x10xf32>
    %95 = vector.broadcast %27 : vector<1x10xf32> to vector<16x10xf32>
    %96 = arith.mulf %94, %95 : vector<16x10xf32>
    %cst_27 = arith.constant dense<0.000000e+00> : vector<16xf32>
    %97 = vector.multi_reduction <add>, %96, %cst_27 [1] : vector<16x10xf32> to vector<16xf32>
    %98 = vector.shape_cast %97 : vector<16xf32> to vector<16x1xf32>
    %cst_28 = arith.constant dense<0.000000e+00> : vector<16xf32>
    %99 = vector.multi_reduction <add>, %94, %cst_28 [1] : vector<16x10xf32> to vector<16xf32>
    %100 = vector.shape_cast %99 : vector<16xf32> to vector<16x1xf32>
    %cst_29 = arith.constant 5.000000e-01 : f32
    %101 = vector.broadcast %cst_29 : f32 to vector<16x1xf32>
    %102 = arith.cmpf ogt, %100, %101 : vector<16x1xf32>
    %103 = arith.fptosi %98 : vector<16x1xf32> to vector<16x1xi32>
    %c0_30 = arith.constant 0 : index
    %c0_31 = arith.constant 0 : index
    %104 = vector.load %arg2[%c0_30, %c0_31] : memref<16x1xi32, #tpu.memory_space<vmem>>, vector<16x1xi32>
    %105 = arith.select %102, %103, %104 : vector<16x1xi1>, vector<16x1xi32>
    %c0_32 = arith.constant 0 : index
    %c0_33 = arith.constant 0 : index
    %106 = vector.load %arg6[%c0_32, %c0_33] : memref<256x128xbf16, #tpu.memory_space<vmem>>, vector<256x128xbf16>
    %c0_34 = arith.constant 0 : index
    %c0_35 = arith.constant 0 : index
    %107 = vector.load %arg7[%c0_34, %c0_35] : memref<128x128xbf16, #tpu.memory_space<vmem>>, vector<128x128xbf16>
    %c0_36 = arith.constant 0 : index
    %c0_37 = arith.constant 0 : index
    %108 = vector.load %arg8[%c0_36, %c0_37] : memref<128x256xbf16, #tpu.memory_space<vmem>>, vector<128x256xbf16>
    %c0_38 = arith.constant 0 : index
    %c0_39 = arith.constant 0 : index
    %109 = vector.load %arg9[%c0_38, %c0_39] : memref<1x256xi32, #tpu.memory_space<vmem>>, vector<1x256xi32>
    %110 = tpu.iota {dimensions = array<i32: 1>} : vector<16x256xi32>
    %111 = vector.broadcast %105 : vector<16x1xi32> to vector<16x256xi32>
    %112 = arith.cmpi eq, %110, %111 : vector<16x256xi32>
    %113 = arith.extui %112 : vector<16x256xi1> to vector<16x256xi32>
    %114 = arith.sitofp %113 : vector<16x256xi32> to vector<16x256xf32>
    %115 = arith.truncf %114 : vector<16x256xf32> to vector<16x256xbf16>
    %cst_40 = arith.constant dense<0.000000e+00> : vector<16x128xf32>
    %116 = tpu.matmul %115, %106, %cst_40 {dimension_numbers = #tpu.dot_dimension_numbers<[1], [0], [0], [1], [0, 0, 1, 1], [], []>} : vector<16x256xbf16>, vector<256x128xbf16>, vector<16x128xf32> -> vector<16x128xf32>
    %c0_41 = arith.constant 0 : index
    %c0_42 = arith.constant 0 : index
    %117 = vector.load %arg4[%c0_41, %c0_42] : memref<16x384xbf16, #tpu.memory_space<vmem>>, vector<16x384xbf16>
    %c0_43 = arith.constant 0 : index
    %c0_44 = arith.constant 0 : index
    %118 = vector.load %arg5[%c0_43, %c0_44] : memref<384x128xbf16, #tpu.memory_space<vmem>>, vector<384x128xbf16>
    %cst_45 = arith.constant dense<0.000000e+00> : vector<16x128xf32>
    %119 = tpu.matmul %117, %118, %cst_45 {dimension_numbers = #tpu.dot_dimension_numbers<[1], [0], [0], [1], [0, 0, 1, 1], [], []>} : vector<16x384xbf16>, vector<384x128xbf16>, vector<16x128xf32> -> vector<16x128xf32>
    %120 = arith.addf %116, %119 : vector<16x128xf32>
    %121 = arith.negf %120 : vector<16x128xf32>
    %122 = math.exp %121 : vector<16x128xf32>
    %cst_46 = arith.constant 1.000000e+00 : f32
    %123 = vector.broadcast %cst_46 : f32 to vector<16x128xf32>
    %124 = arith.addf %123, %122 : vector<16x128xf32>
    %125 = arith.divf %123, %124 : vector<16x128xf32>
    %126 = arith.mulf %120, %125 : vector<16x128xf32>
    %127 = arith.truncf %126 : vector<16x128xf32> to vector<16x128xbf16>
    %cst_47 = arith.constant dense<0.000000e+00> : vector<4x128xf32>
    %128 = tpu.matmul %70, %127, %cst_47 {dimension_numbers = #tpu.dot_dimension_numbers<[1], [0], [0], [1], [0, 0, 1, 1], [], []>} : vector<4x16xbf16>, vector<16x128xbf16>, vector<4x128xf32> -> vector<4x128xf32>
    %129 = tpu.iota {dimensions = array<i32: 1>} : vector<4x256xi32>
    %130 = arith.sitofp %129 : vector<4x256xi32> to vector<4x256xf32>
    %131 = arith.truncf %128 : vector<4x128xf32> to vector<4x128xbf16>
    %cst_48 = arith.constant dense<0.000000e+00> : vector<4x256xf32>
    %132 = tpu.matmul %131, %108, %cst_48 {dimension_numbers = #tpu.dot_dimension_numbers<[1], [0], [0], [1], [0, 0, 1, 1], [], []>} : vector<4x128xbf16>, vector<128x256xbf16>, vector<4x256xf32> -> vector<4x256xf32>
    %cst_49 = arith.constant dense<0xFF800000> : vector<4xf32>
    %133 = vector.multi_reduction <maximumf>, %132, %cst_49 [1] : vector<4x256xf32> to vector<4xf32>
    %134 = vector.shape_cast %133 : vector<4xf32> to vector<4x1xf32>
    %135 = vector.broadcast %134 : vector<4x1xf32> to vector<4x256xf32>
    %136 = arith.cmpf oeq, %132, %135 : vector<4x256xf32>
    %cst_50 = arith.constant 2.560000e+02 : f32
    %137 = vector.broadcast %cst_50 : f32 to vector<4x256xf32>
    %138 = arith.select %136, %130, %137 : vector<4x256xi1>, vector<4x256xf32>
    %cst_51 = arith.constant dense<0x7F800000> : vector<4xf32>
    %139 = vector.multi_reduction <minimumf>, %138, %cst_51 [1] : vector<4x256xf32> to vector<4xf32>
    %140 = vector.shape_cast %139 : vector<4xf32> to vector<4x1xf32>
    %141 = arith.fptosi %140 : vector<4x1xf32> to vector<4x1xi32>
    %142 = vector.broadcast %141 : vector<4x1xi32> to vector<4x256xi32>
    %143 = arith.cmpi eq, %129, %142 : vector<4x256xi32>
    %c0_i32_52 = arith.constant 0 : i32
    %144 = vector.shape_cast %109 : vector<1x256xi32> to vector<1x256xi32>
    %145 = vector.broadcast %144 : vector<1x256xi32> to vector<4x256xi32>
    %146 = vector.broadcast %c0_i32_52 : i32 to vector<4x256xi32>
    %147 = arith.select %143, %145, %146 : vector<4x256xi1>, vector<4x256xi32>
    %cst_53 = arith.constant dense<0> : vector<4xi32>
    %148 = vector.multi_reduction <add>, %147, %cst_53 [1] : vector<4x256xi32> to vector<4xi32>
    %149 = vector.shape_cast %148 : vector<4xi32> to vector<4x1xi32>
    %150 = arith.addi %141, %149 : vector<4x1xi32>
    %151 = vector.broadcast %150 : vector<4x1xi32> to vector<4x256xi32>
    %152 = arith.cmpi eq, %129, %151 : vector<4x256xi32>
    %153 = arith.extui %152 : vector<4x256xi1> to vector<4x256xi32>
    %154 = arith.sitofp %153 : vector<4x256xi32> to vector<4x256xf32>
    %155 = arith.truncf %154 : vector<4x256xf32> to vector<4x256xbf16>
    %cst_54 = arith.constant dense<0.000000e+00> : vector<4x128xf32>
    %156 = tpu.matmul %155, %106, %cst_54 {dimension_numbers = #tpu.dot_dimension_numbers<[1], [0], [0], [1], [0, 0, 1, 1], [], []>} : vector<4x256xbf16>, vector<256x128xbf16>, vector<4x128xf32> -> vector<4x128xf32>
    %157 = arith.truncf %128 : vector<4x128xf32> to vector<4x128xbf16>
    %cst_55 = arith.constant dense<0.000000e+00> : vector<4x128xf32>
    %158 = tpu.matmul %157, %107, %cst_55 {dimension_numbers = #tpu.dot_dimension_numbers<[1], [0], [0], [1], [0, 0, 1, 1], [], []>} : vector<4x128xbf16>, vector<128x128xbf16>, vector<4x128xf32> -> vector<4x128xf32>
    %159 = arith.addf %156, %158 : vector<4x128xf32>
    %160 = arith.negf %159 : vector<4x128xf32>
    %161 = math.exp %160 : vector<4x128xf32>
    %cst_56 = arith.constant 1.000000e+00 : f32
    %162 = vector.broadcast %cst_56 : f32 to vector<4x128xf32>
    %163 = arith.addf %162, %161 : vector<4x128xf32>
    %164 = arith.divf %162, %163 : vector<4x128xf32>
    %165 = arith.mulf %159, %164 : vector<4x128xf32>
    %166 = arith.truncf %165 : vector<4x128xf32> to vector<4x128xbf16>
    %cst_57 = arith.constant dense<0.000000e+00> : vector<4x256xf32>
    %167 = tpu.matmul %166, %108, %cst_57 {dimension_numbers = #tpu.dot_dimension_numbers<[1], [0], [0], [1], [0, 0, 1, 1], [], []>} : vector<4x128xbf16>, vector<128x256xbf16>, vector<4x256xf32> -> vector<4x256xf32>
    %cst_58 = arith.constant dense<0xFF800000> : vector<4xf32>
    %168 = vector.multi_reduction <maximumf>, %167, %cst_58 [1] : vector<4x256xf32> to vector<4xf32>
    %169 = vector.shape_cast %168 : vector<4xf32> to vector<4x1xf32>
    %170 = vector.broadcast %169 : vector<4x1xf32> to vector<4x256xf32>
    %171 = arith.cmpf oeq, %167, %170 : vector<4x256xf32>
    %cst_59 = arith.constant 2.560000e+02 : f32
    %172 = vector.broadcast %cst_59 : f32 to vector<4x256xf32>
    %173 = arith.select %171, %130, %172 : vector<4x256xi1>, vector<4x256xf32>
    %cst_60 = arith.constant dense<0x7F800000> : vector<4xf32>
    %174 = vector.multi_reduction <minimumf>, %173, %cst_60 [1] : vector<4x256xf32> to vector<4xf32>
    %175 = vector.shape_cast %174 : vector<4xf32> to vector<4x1xf32>
    %176 = arith.fptosi %175 : vector<4x1xf32> to vector<4x1xi32>
    %177 = vector.broadcast %176 : vector<4x1xi32> to vector<4x256xi32>
    %178 = arith.cmpi eq, %129, %177 : vector<4x256xi32>
    %c0_i32_61 = arith.constant 0 : i32
    %179 = vector.shape_cast %109 : vector<1x256xi32> to vector<1x256xi32>
    %180 = vector.broadcast %179 : vector<1x256xi32> to vector<4x256xi32>
    %181 = vector.broadcast %c0_i32_61 : i32 to vector<4x256xi32>
    %182 = arith.select %178, %180, %181 : vector<4x256xi1>, vector<4x256xi32>
    %cst_62 = arith.constant dense<0> : vector<4xi32>
    %183 = vector.multi_reduction <add>, %182, %cst_62 [1] : vector<4x256xi32> to vector<4xi32>
    %184 = vector.shape_cast %183 : vector<4xi32> to vector<4x1xi32>
    %185 = arith.addi %176, %184 : vector<4x1xi32>
    %186 = vector.broadcast %185 : vector<4x1xi32> to vector<4x256xi32>
    %187 = arith.cmpi eq, %129, %186 : vector<4x256xi32>
    %188 = arith.extui %187 : vector<4x256xi1> to vector<4x256xi32>
    %189 = arith.sitofp %188 : vector<4x256xi32> to vector<4x256xf32>
    %190 = arith.truncf %189 : vector<4x256xf32> to vector<4x256xbf16>
    %cst_63 = arith.constant dense<0.000000e+00> : vector<4x128xf32>
    %191 = tpu.matmul %190, %106, %cst_63 {dimension_numbers = #tpu.dot_dimension_numbers<[1], [0], [0], [1], [0, 0, 1, 1], [], []>} : vector<4x256xbf16>, vector<256x128xbf16>, vector<4x128xf32> -> vector<4x128xf32>
    %192 = arith.truncf %165 : vector<4x128xf32> to vector<4x128xbf16>
    %cst_64 = arith.constant dense<0.000000e+00> : vector<4x128xf32>
    %193 = tpu.matmul %192, %107, %cst_64 {dimension_numbers = #tpu.dot_dimension_numbers<[1], [0], [0], [1], [0, 0, 1, 1], [], []>} : vector<4x128xbf16>, vector<128x128xbf16>, vector<4x128xf32> -> vector<4x128xf32>
    %194 = arith.addf %191, %193 : vector<4x128xf32>
    %195 = arith.negf %194 : vector<4x128xf32>
    %196 = math.exp %195 : vector<4x128xf32>
    %cst_65 = arith.constant 1.000000e+00 : f32
    %197 = vector.broadcast %cst_65 : f32 to vector<4x128xf32>
    %198 = arith.addf %197, %196 : vector<4x128xf32>
    %199 = arith.divf %197, %198 : vector<4x128xf32>
    %200 = arith.mulf %194, %199 : vector<4x128xf32>
    %201 = arith.truncf %200 : vector<4x128xf32> to vector<4x128xbf16>
    %cst_66 = arith.constant dense<0.000000e+00> : vector<4x256xf32>
    %202 = tpu.matmul %201, %108, %cst_66 {dimension_numbers = #tpu.dot_dimension_numbers<[1], [0], [0], [1], [0, 0, 1, 1], [], []>} : vector<4x128xbf16>, vector<128x256xbf16>, vector<4x256xf32> -> vector<4x256xf32>
    %cst_67 = arith.constant dense<0xFF800000> : vector<4xf32>
    %203 = vector.multi_reduction <maximumf>, %202, %cst_67 [1] : vector<4x256xf32> to vector<4xf32>
    %204 = vector.shape_cast %203 : vector<4xf32> to vector<4x1xf32>
    %205 = vector.broadcast %204 : vector<4x1xf32> to vector<4x256xf32>
    %206 = arith.cmpf oeq, %202, %205 : vector<4x256xf32>
    %cst_68 = arith.constant 2.560000e+02 : f32
    %207 = vector.broadcast %cst_68 : f32 to vector<4x256xf32>
    %208 = arith.select %206, %130, %207 : vector<4x256xi1>, vector<4x256xf32>
    %cst_69 = arith.constant dense<0x7F800000> : vector<4xf32>
    %209 = vector.multi_reduction <minimumf>, %208, %cst_69 [1] : vector<4x256xf32> to vector<4xf32>
    %210 = vector.shape_cast %209 : vector<4xf32> to vector<4x1xf32>
    %211 = arith.fptosi %210 : vector<4x1xf32> to vector<4x1xi32>
    %212 = vector.broadcast %211 : vector<4x1xi32> to vector<4x256xi32>
    %213 = arith.cmpi eq, %129, %212 : vector<4x256xi32>
    %c0_i32_70 = arith.constant 0 : i32
    %214 = vector.shape_cast %109 : vector<1x256xi32> to vector<1x256xi32>
    %215 = vector.broadcast %214 : vector<1x256xi32> to vector<4x256xi32>
    %216 = vector.broadcast %c0_i32_70 : i32 to vector<4x256xi32>
    %217 = arith.select %213, %215, %216 : vector<4x256xi1>, vector<4x256xi32>
    %cst_71 = arith.constant dense<0> : vector<4xi32>
    %218 = vector.multi_reduction <add>, %217, %cst_71 [1] : vector<4x256xi32> to vector<4xi32>
    %219 = vector.shape_cast %218 : vector<4xi32> to vector<4x1xi32>
    %220 = arith.addi %211, %219 : vector<4x1xi32>
    %221 = tpu.iota {dimensions = array<i32: 1>} : vector<4x3xi32>
    %c0_i32_72 = arith.constant 0 : i32
    %222 = vector.broadcast %c0_i32_72 : i32 to vector<4x3xi32>
    %c0_i32_73 = arith.constant 0 : i32
    %223 = vector.broadcast %c0_i32_73 : i32 to vector<4x3xi32>
    %224 = arith.cmpi eq, %221, %223 : vector<4x3xi32>
    %225 = vector.shape_cast %150 : vector<4x1xi32> to vector<4x1xi32>
    %226 = vector.broadcast %225 : vector<4x1xi32> to vector<4x3xi32>
    %227 = arith.select %224, %226, %222 : vector<4x3xi1>, vector<4x3xi32>
    %c1_i32_74 = arith.constant 1 : i32
    %228 = vector.broadcast %c1_i32_74 : i32 to vector<4x3xi32>
    %229 = arith.cmpi eq, %221, %228 : vector<4x3xi32>
    %230 = vector.shape_cast %185 : vector<4x1xi32> to vector<4x1xi32>
    %231 = vector.broadcast %230 : vector<4x1xi32> to vector<4x3xi32>
    %232 = arith.select %229, %231, %227 : vector<4x3xi1>, vector<4x3xi32>
    %c2_i32_75 = arith.constant 2 : i32
    %233 = vector.broadcast %c2_i32_75 : i32 to vector<4x3xi32>
    %234 = arith.cmpi eq, %221, %233 : vector<4x3xi32>
    %235 = vector.shape_cast %220 : vector<4x1xi32> to vector<4x1xi32>
    %236 = vector.broadcast %235 : vector<4x1xi32> to vector<4x3xi32>
    %237 = arith.select %234, %236, %232 : vector<4x3xi1>, vector<4x3xi32>
    %c0_76 = arith.constant 0 : index
    %c0_77 = arith.constant 0 : index
    %238 = vector.load %arg14[%c0_76, %c0_77] : memref<4x3xi32, #tpu.memory_space<vmem>>, vector<4x3xi32>
    tpu.vector_store %arg14[%c0_76, %c0_77], %237 {strides = array<i32>} : memref<4x3xi32, #tpu.memory_space<vmem>>, vector<4x3xi32>,
    return
  }
}

</mosaic_0001>

<llo_original>
// kernel: forward.1
$region0: #{forward.1}
  #allocation0 [shape = 'u32[]', space=smem, size = 0x4, offset = 0x4, fixed_abs, tag = 'smem constant byte address 0x4 - core index']
  #allocation1 [shape = 'u32[72,128]{1,0:T(1,128)}', space=vmem, size = 0x9000, scoped, tag = 'internal scratch']
  %s0 = inlined_call_operand.hbm [shape: s32[4], index: 0, kind: input, shape index: {}]
  %s1 = inlined_call_operand.vmem [shape: f32[10,256], index: 1, kind: input, shape index: {}]
  %s2 = inlined_call_operand.vmem [shape: s32[16,1], index: 2, kind: input, shape index: {}]
  %s3 = inlined_call_operand.vmem [shape: f32[1,10], index: 3, kind: input, shape index: {}]
  %s4 = inlined_call_operand.vmem [shape: bf16[16,384], index: 4, kind: input, shape index: {}]
  %s5 = inlined_call_operand.hbm [shape: bf16[384,128], index: 5, kind: input, shape index: {}]
  %s6 = inlined_call_operand.hbm [shape: bf16[256,128], index: 6, kind: input, shape index: {}]
  %s7 = inlined_call_operand.hbm [shape: bf16[128,128], index: 7, kind: input, shape index: {}]
  %s8 = inlined_call_operand.hbm [shape: bf16[128,256], index: 8, kind: input, shape index: {}]
  %s9 = inlined_call_operand.vmem [shape: s32[1,256], index: 9, kind: input, shape index: {}]
  %s10 = inlined_call_operand.hbm [shape: bf16[10,10], index: 10, kind: input, shape index: {}]
  %s11 = inlined_call_operand.vmem [shape: f32[1,10], index: 11, kind: input, shape index: {}]
  %s12 = inlined_call_operand.vmem [shape: f32[4,10], index: 12, kind: input, shape index: {}]
  %s13 = inlined_call_operand.vmem [shape: s32[10,1], index: 13, kind: output, shape index: {0}]
  %s14 = inlined_call_operand.vmem [shape: s32[4,3], index: 14, kind: output, shape index: {1}]
  %15 = xla_tuple %s13, %s14
  %s16 = sld [smem:[#allocation0]]
  $region94: #{forward.1} parent=0
    _
  %s18 = ssub.s32 1, %s16
  %s19 = scalar_select 0, %s18, %s16
  $region1: #{forward.1} parent=0
    #allocation2 [shape = 'u8[512]{0}', space=smem, size = 0x200, scoped, tag = 'input window, operand 0, single buffered']
    #allocation3 [shape = 's32[1]{0}', space=sflag, size = 0x4, scoped, tag = 'scoped memory for forward.1']
    #allocation4 [shape = 's32[1]{0}', space=sflag, size = 0x4, scoped, tag = 'scoped memory for forward.1']
    #allocation5 [shape = 'u8[98304]{0}', space=vmem, size = 0x18000, scoped, tag = 'input window, operand 5, single buffered']
    #allocation6 [shape = 'u8[65536]{0}', space=vmem, size = 0x10000, scoped, tag = 'input window, operand 6, single buffered']
    #allocation7 [shape = 's32[1]{0}', space=sflag, size = 0x4, scoped, tag = 'scoped memory for forward.1']
    #allocation8 [shape = 'u8[32768]{0}', space=vmem, size = 0x8000, scoped, tag = 'input window, operand 7, single buffered']
    #allocation9 [shape = 'u8[65536]{0}', space=vmem, size = 0x10000, scoped, tag = 'input window, operand 8, single buffered']
    #allocation10 [shape = 's32[1]{0}', space=sflag, size = 0x4, scoped, tag = 'scoped memory for forward.1']
    #allocation11 [shape = 'u8[4096]{0}', space=vmem, size = 0x1000, scoped, tag = 'input window, operand 10, single buffered']
    %20 = vsyncpa [#allocation4], 0
    %21 = vsyncpa [#allocation3], 0
    %22 = vsyncpa [#allocation7], 0
    %23 = vsyncpa [#allocation10], 0
    // Predicated region
    $region2: #{forward.1} parent=1 // pred_check
      _
    $region3: #{forward.1} parent=1 // pred_check_branch
      %25 = sbr.rel (0) target = $region5
    $region4: #{forward.1} parent=1 // pred_region
      %27 = vsyncadd [#allocation4], 0
      %s29 = sshll.u32 %s0, 4
      %s30 = int_to_ptr.hbm [resolvable:$true] %s29
      %32 = dma.hbm_to_smem %s30, 16, [#allocation2], [#allocation4]
    $region5: #{forward.1} parent=1 // pred_fallthru
      _
    // Predicated region
    $region6: #{forward.1} parent=1 // pred_check
      _
    $region7: #{forward.1} parent=1 // pred_check_branch
      %34 = sbr.rel (0) target = $region9
    $region8: #{forward.1} parent=1 // pred_region
      _
    $region9: #{forward.1} parent=1 // pred_fallthru
      _
    // Predicated region
    $region10: #{forward.1} parent=1 // pred_check
      _
    $region11: #{forward.1} parent=1 // pred_check_branch
      %36 = sbr.rel (0) target = $region13
    $region12: #{forward.1} parent=1 // pred_region
      _
    $region13: #{forward.1} parent=1 // pred_fallthru
      _
    // Predicated region
    $region14: #{forward.1} parent=1 // pred_check
      _
    $region15: #{forward.1} parent=1 // pred_check_branch
      %38 = sbr.rel (0) target = $region17
    $region16: #{forward.1} parent=1 // pred_region
      _
    $region17: #{forward.1} parent=1 // pred_fallthru
      _
    // Predicated region
    $region18: #{forward.1} parent=1 // pred_check
      _
    $region19: #{forward.1} parent=1 // pred_check_branch
      %40 = sbr.rel (0) target = $region21
    $region20: #{forward.1} parent=1 // pred_region
      _
    $region21: #{forward.1} parent=1 // pred_fallthru
      _
    // Predicated region
    $region22: #{forward.1} parent=1 // pred_check
      _
    $region23: #{forward.1} parent=1 // pred_check_branch
      %42 = sbr.rel (0) target = $region25
    $region24: #{forward.1} parent=1 // pred_region
      %44 = vsyncadd [#allocation3], 0
      %s45 = sshll.u32 %s5, 4
      %s46 = int_to_ptr.hbm [resolvable:$true] %s45
      %s47 = sshll.u32 [#allocation5], 4
      %s48 = int_to_ptr.vmem [resolvable:$true] %s47
      %53 = dma.hbm_to_vmem [thread:$0]  %s46, 3072, %s48, [#allocation3], 64, 64, 4
    $region25: #{forward.1} parent=1 // pred_fallthru
      _
    // Predicated region
    $region26: #{forward.1} parent=1 // pred_check
      _
    $region27: #{forward.1} parent=1 // pred_check_branch
      %55 = sbr.rel (0) target = $region29
    $region28: #{forward.1} parent=1 // pred_region
      %57 = vsyncadd [#allocation7], 0
      %s58 = sshll.u32 %s6, 4
      %s59 = int_to_ptr.hbm [resolvable:$true] %s58
      %s60 = sshll.u32 [#allocation6], 4
      %s61 = int_to_ptr.vmem [resolvable:$true] %s60
      %66 = dma.hbm_to_vmem [thread:$0]  %s59, 2048, %s61, [#allocation7], 64, 64, 4
    $region29: #{forward.1} parent=1 // pred_fallthru
      _
    // Predicated region
    $region30: #{forward.1} parent=1 // pred_check
      _
    $region31: #{forward.1} parent=1 // pred_check_branch
      %68 = sbr.rel (0) target = $region33
    $region32: #{forward.1} parent=1 // pred_region
      %70 = vsyncadd [#allocation7], 0
      %s71 = sshll.u32 %s7, 4
      %s72 = int_to_ptr.hbm [resolvable:$true] %s71
      %s73 = sshll.u32 [#allocation8], 4
      %s74 = int_to_ptr.vmem [resolvable:$true] %s73
      %79 = dma.hbm_to_vmem [thread:$0]  %s72, 1024, %s74, [#allocation7], 64, 64, 4
    $region33: #{forward.1} parent=1 // pred_fallthru
      _
    // Predicated region
    $region34: #{forward.1} parent=1 // pred_check
      _
    $region35: #{forward.1} parent=1 // pred_check_branch
      %81 = sbr.rel (0) target = $region37
    $region36: #{forward.1} parent=1 // pred_region
      %83 = vsyncadd [#allocation10], 0
      %s84 = sshll.u32 %s8, 4
      %s85 = int_to_ptr.hbm [resolvable:$true] %s84
      %s86 = sshll.u32 [#allocation9], 4
      %s87 = int_to_ptr.vmem [resolvable:$true] %s86
      %92 = dma.hbm_to_vmem [thread:$0]  %s85, 2048, %s87, [#allocation10], 128, 128, 8
    $region37: #{forward.1} parent=1 // pred_fallthru
      _
    // Predicated region
    $region38: #{forward.1} parent=1 // pred_check
      _
    $region39: #{forward.1} parent=1 // pred_check_branch
      %94 = sbr.rel (0) target = $region41
    $region40: #{forward.1} parent=1 // pred_region
      _
    $region41: #{forward.1} parent=1 // pred_fallthru
      _
    // Predicated region
    $region42: #{forward.1} parent=1 // pred_check
      _
    $region43: #{forward.1} parent=1 // pred_check_branch
      %96 = sbr.rel (0) target = $region45
    $region44: #{forward.1} parent=1 // pred_region
      %98 = vsyncadd [#allocation10], 0
      %s99 = sshll.u32 %s10, 4
      %s100 = int_to_ptr.hbm [resolvable:$true] %s99
      %s101 = sshll.u32 [#allocation11], 4
      %s102 = int_to_ptr.vmem [resolvable:$true] %s101
      %107 = dma.hbm_to_vmem [thread:$0]  %s100, 128, %s102, [#allocation10], 64, 64, 4
    $region45: #{forward.1} parent=1 // pred_fallthru
      _
    // Predicated region
    $region46: #{forward.1} parent=1 // pred_check
      _
    $region47: #{forward.1} parent=1 // pred_check_branch
      %109 = sbr.rel (0) target = $region49
    $region48: #{forward.1} parent=1 // pred_region
      _
    $region49: #{forward.1} parent=1 // pred_fallthru
      _
    // Predicated region
    $region50: #{forward.1} parent=1 // pred_check
      _
    $region51: #{forward.1} parent=1 // pred_check_branch
      %111 = sbr.rel (0) target = $region53
    $region52: #{forward.1} parent=1 // pred_region
      _
    $region53: #{forward.1} parent=1 // pred_fallthru
      _
    // Predicated region
    $region54: #{forward.1} parent=1 // pred_check
      _
    $region55: #{forward.1} parent=1 // pred_check_branch
      %113 = sbr.rel (0) target = $region57
    $region56: #{forward.1} parent=1 // pred_region
      %115 = dma.done [#allocation4], 16
    $region57: #{forward.1} parent=1 // pred_fallthru
      _
    // Predicated region
    $region58: #{forward.1} parent=1 // pred_check
      _
    $region59: #{forward.1} parent=1 // pred_check_branch
      %117 = sbr.rel (0) target = $region61
    $region60: #{forward.1} parent=1 // pred_region
      %119 = dma.done [#allocation3], 3072
    $region61: #{forward.1} parent=1 // pred_fallthru
      _
    // Predicated region
    $region62: #{forward.1} parent=1 // pred_check
      _
    $region63: #{forward.1} parent=1 // pred_check_branch
      %121 = sbr.rel (0) target = $region65
    $region64: #{forward.1} parent=1 // pred_region
      %123 = dma.done [#allocation7], 2048
    $region65: #{forward.1} parent=1 // pred_fallthru
      _
    // Predicated region
    $region66: #{forward.1} parent=1 // pred_check
      _
    $region67: #{forward.1} parent=1 // pred_check_branch
      %125 = sbr.rel (0) target = $region69
    $region68: #{forward.1} parent=1 // pred_region
      %127 = dma.done [#allocation7], 1024
    $region69: #{forward.1} parent=1 // pred_fallthru
      _
    // Predicated region
    $region70: #{forward.1} parent=1 // pred_check
      _
    $region71: #{forward.1} parent=1 // pred_check_branch
      %129 = sbr.rel (0) target = $region73
    $region72: #{forward.1} parent=1 // pred_region
      %131 = dma.done [#allocation10], 2048
    $region73: #{forward.1} parent=1 // pred_fallthru
      _
    // Predicated region
    $region74: #{forward.1} parent=1 // pred_check
      _
    $region75: #{forward.1} parent=1 // pred_check_branch
      %133 = sbr.rel (0) target = $region77
    $region76: #{forward.1} parent=1 // pred_region
      %135 = dma.done [#allocation10], 128
    $region77: #{forward.1} parent=1 // pred_fallthru
      _
    %136 = sfence
    %s138 = sld [smem:[#allocation2]]
    %s139 = ssub.s32 %s138, 1
    %s140 = sld [smem:[#allocation2 + $0x1]]
    %s141 = sadd.s32 %s138, %s140
    %s142 = ssub.s32 %s141, 1
    %v143 = vld [vmem:[%s1] sm:$0xff]
    %v144 = vld [vmem:[%s1 + $0x8] sm:$0xff]
    %v145 = vld [vmem:[%s1 + $0x10] sm:$0x3]
    %v146 = vld [vmem:[%s1 + $0x18] sm:$0x3]
    %v147 = vlaneseq
    %v148 = vand.u32 %v147, 127
    %v149 = vadd.s32 %v148, 128
    %v150 = vcvt.s32.f32 %v148
    %v151 = vcvt.s32.f32 %v149
    %v152 = vmax.f32 %v143, %v144
    %153 = vmax.xlane.f32.xlu0 %v152
    %v154 = vpop.xlane.xlu0 %153
    %vm155 = vcmask 1041408
    %v156 = vsel %vm155, %v145, -inf
    %v157 = vsel %vm155, %v146, -inf
    %v158 = vmax.f32 %v156, %v157
    %159 = vmax.xlane.f32.xlu0 %v158
    %v160 = vpop.xlane.xlu0 %159
    %vm161 = vcmp.eq.f32.partialorder %v143, %v154
    %vm162 = vcmp.eq.f32.partialorder %v144, %v154
    %vm163 = vcmp.eq.f32.partialorder %v145, %v160
    %vm164 = vcmp.eq.f32.partialorder %v146, %v160
    %v165 = vsel %vm161, %v150, 256.0
    %v166 = vsel %vm162, %v151, 256.0
    %v167 = vsel %vm163, %v150, 256.0
    %v168 = vsel %vm164, %v151, 256.0
    %v169 = vmin.f32 %v165, %v166
    %170 = vmin.xlane.f32.xlu0 %v169
    %v171 = vpop.xlane.xlu0 %170
    %v172 = vsel %vm155, %v167, inf
    %v173 = vsel %vm155, %v168, inf
    %v174 = vmin.f32 %v172, %v173
    %175 = vmin.xlane.f32.xlu0 %v174
    %v176 = vpop.xlane.xlu0 %175
    %v177 = vcvt.f32.s32.to.zero.pseudo %v171
    %v178 = vcvt.f32.s32.to.zero.pseudo %v176
    %vm179 = vcmask 7168
    %180 = vst.msk [vmem:[%s13] sm:$0xff] %vm179, %v177
    %vm181 = vcmask 1024
    %182 = vst.msk [vmem:[%s13 + $0x8] sm:$0x3] %vm181, %v178
    %v183 = vlaneseq
    %v184 = vshrl.u32 %v183, 7
    %v185 = vadd.s32 %v184, 8
    %vm186 = vcmp.eq.s32.totalorder %v184, %v148
    %vm187 = vcmp.eq.s32.totalorder %v185, %v148
    %v188 = vsel %vm186, 1, 0
    %v189 = vsel %vm187, 1, 0
    %v190 = vcvt.s32.f32 %v188
    %v191 = vcvt.s32.f32 %v189
    %v192 = vmul.f32 %v190, %v171
    %v193 = vmul.f32 %v191, %v176
    %vm194 = vcmask 80896
    %v195 = vsel %vm194, %v192, 0.0
    %vm196 = vcmask 74752
    %v197 = vsel %vm196, %v193, 0.0
    %v198 = vadd.f32 %v195, %v197
    %v199 = vrot.slane %v198, 4
    %v200 = vadd.f32 %v198, %v199
    %v201 = vrot.slane %v200, 2
    %v202 = vadd.f32 %v200, %v201
    %v203 = vrot.slane %v202, 1
    %v204 = vadd.f32 %v202, %v203
    %v205 = vld [vmem:[%s3] sm:$0x1]
    %vm206 = vcmp.eq.f32.partialorder %v204, %v205
    %v207 = vsel %vm206, 1, 0
    %v208 = vcvt.s32.f32 %v207
    %v209 = vpack.c.bf16 %v208, %v208
    %v210 = vld [vmem:[#allocation11] sm:$0xf]
    %v211 = vld [vmem:[#allocation11 + $0x4] sm:$0x1]
    %v214 = vunpack.c.l.b16 %v210
    %v215 = vunpack.c.l.b16 %v211
    %v216 = vpack.c.b16 %v215, %v214
    %v218 = vsel %vm194, %v209, 0
    %vm220 = vcmask 1044480
    %v222 = vsel %vm220, %v216, 0
    %224 = vmatpush.bf16.msra.mxu0 0
    %225 = vmatpush.bf16.msra.mxu0 0
    %226 = vmatpush.bf16.msra.mxu0 0
    %227 = vmatpush.bf16.msra.mxu0 0
    %228 = vmatpush.bf16.msra.mxu0 0
    %229 = vmatpush.bf16.msra.mxu0 0
    %230 = vmatpush.bf16.msra.mxu0 0
    %231 = vmatpush.bf16.msra.mxu0 %v222
    %232 = vmatmul.bf16.gmra.mxu0 %v218
    %v233 = vpop.f32.mrf.mxu0
    %v234 = vadd.f32 0.0, %v233
    %v235 = vpop.f32.mrf.mxu0
    %236 = vdwg.mxu0
    %v237 = vld [vmem:[%s11] sm:$0x1]
    %vm238 = vcmp.eq.f32.partialorder %v234, %v237
    %v239 = vsel %vm238, 1, 0
    %v240 = vcvt.s32.f32 %v239
    %v241 = vld [vmem:[%s12] sm:$0xf]
    %v242 = vperm.slane %v240, 0
    %v243 = vmul.f32 %v241, %v242
    %vm244 = vcmask 76800
    %v245 = vsel %vm244, %v243, 0.0
    %246 = vadd.xlane.f32.xlu0 %v245
    %v247 = vpop.xlane.xlu0 %246
    %v248 = vsub.s32 %v184, 2
    %v249 = vmul.u32 %v248, 4
    %v250 = vadd.s32 %v249, 8
    %v251 = vcvt.f32.s32.to.zero.pseudo %v247
    %v252 = vadd.s32 %v250, %v251
    %vm253 = vcmp.eq.s32.totalorder %v184, 0
    %v254 = vstv %s139
    %v255 = vsel %vm253, %v254, 0
    %vm256 = vcmp.eq.s32.totalorder %v184, 1
    %v257 = vstv %s142
    %v258 = vsel %vm256, %v257, %v255
    %vm259 = vcmp.lt.s32.totalorder %v184, 2
    %v260 = vsel %vm259, %v258, %v252
    %vm261 = vcmp.eq.s32.totalorder %v148, %v260
    %v262 = vsel %vm261, 1, 0
    %v263 = vcvt.s32.f32 %v262
    %v264 = vpack.c.bf16 %v263, %v263
    %vm265 = vcmp.ge.s32.totalorder %v184, 8
    %vm266 = vcmp.ge.s32.totalorder %v185, 8
    %v267 = vsub.s32 %v184, 6
    %v268 = vsub.s32 %v185, 6
    %vm269 = vcmp.eq.s32.totalorder %v148, %v267
    %vm270 = vcmp.eq.s32.totalorder %v148, %v268
    %vm271 = vmand %vm265, %vm269
    %vm272 = vmand %vm266, %vm270
    %v273 = vsel %vm271, 1, 0
    %v274 = vsel %vm272, 1, 0
    %v275 = vcvt.s32.f32 %v273
    %v276 = vcvt.s32.f32 %v274
    %vm277 = vcmp.eq.s32.totalorder %v148, 0
    %vm278 = vcmp.eq.s32.totalorder %v184, %v254
    %vm279 = vcmp.eq.s32.totalorder %v185, %v254
    %vm280 = vmand %vm277, %vm278
    %vm281 = vmand %vm277, %vm279
    %v282 = vsel %vm280, 1.0, %v275
    %v283 = vsel %vm281, 1.0, %v276
    %vm284 = vcmp.eq.s32.totalorder %v148, 1
    %vm285 = vcmp.eq.s32.totalorder %v184, %v257
    %vm286 = vcmp.eq.s32.totalorder %v185, %v257
    %vm287 = vmand %vm284, %vm285
    %vm288 = vmand %vm284, %vm286
    %v289 = vsel %vm287, 1.0, %v282
    %v290 = vsel %vm288, 1.0, %v283
    %v291 = vmul.f32 %v289, %v204
    %v292 = vmul.f32 %v290, %v204
    %v293 = vsel %vm194, %v291, 0.0
    %294 = vadd.xlane.f32.xlu0 %v293
    %v295 = vpop.xlane.xlu0 %294
    %v296 = vsel %vm194, %v292, 0.0
    %297 = vadd.xlane.f32.xlu0 %v296
    %v298 = vpop.xlane.xlu0 %297
    %v299 = vsel %vm194, %v289, 0.0
    %300 = vadd.xlane.f32.xlu0 %v299
    %v301 = vpop.xlane.xlu0 %300
    %v302 = vsel %vm194, %v290, 0.0
    %303 = vadd.xlane.f32.xlu0 %v302
    %v304 = vpop.xlane.xlu0 %303
    %vm305 = vcmp.gt.f32.partialorder %v301, 0.5
    %vm306 = vcmp.gt.f32.partialorder %v304, 0.5
    %v307 = vcvt.f32.s32.to.zero.pseudo %v295
    %v308 = vcvt.f32.s32.to.zero.pseudo %v298
    %v309 = vld [vmem:[%s2] sm:$0xff]
    %v310 = vld [vmem:[%s2 + $0x8] sm:$0xff]
    %v311 = vsel %vm305, %v307, %v309
    %v312 = vsel %vm306, %v308, %v310
    %v313 = vld [vmem:[#allocation6] sm:$0xf]
    %v314 = vld [vmem:[#allocation6 + $0x4] sm:$0xf]
    %v315 = vld [vmem:[#allocation6 + $0x8] sm:$0xf]
    %v316 = vld [vmem:[#allocation6 + $0xc] sm:$0xf]
    %v317 = vld [vmem:[#allocation6 + $0x10] sm:$0xf]
    %v318 = vld [vmem:[#allocation6 + $0x14] sm:$0xf]
    %v319 = vld [vmem:[#allocation6 + $0x18] sm:$0xf]
    %v320 = vld [vmem:[#allocation6 + $0x1c] sm:$0xf]
    %v321 = vld [vmem:[#allocation6 + $0x20] sm:$0xf]
    %v322 = vld [vmem:[#allocation6 + $0x24] sm:$0xf]
    %v323 = vld [vmem:[#allocation6 + $0x28] sm:$0xf]
    %v324 = vld [vmem:[#allocation6 + $0x2c] sm:$0xf]
    %v325 = vld [vmem:[#allocation6 + $0x30] sm:$0xf]
    %v326 = vld [vmem:[#allocation6 + $0x34] sm:$0xf]
    %v327 = vld [vmem:[#allocation6 + $0x38] sm:$0xf]
    %v328 = vld [vmem:[#allocation6 + $0x3c] sm:$0xf]
    %v329 = vld [vmem:[#allocation6 + $0x40] sm:$0xf]
    %v330 = vld [vmem:[#allocation6 + $0x44] sm:$0xf]
    %v331 = vld [vmem:[#allocation6 + $0x48] sm:$0xf]
    %v332 = vld [vmem:[#allocation6 + $0x4c] sm:$0xf]
    %v333 = vld [vmem:[#allocation6 + $0x50] sm:$0xf]
    %v334 = vld [vmem:[#allocation6 + $0x54] sm:$0xf]
    %v335 = vld [vmem:[#allocation6 + $0x58] sm:$0xf]
    %v336 = vld [vmem:[#allocation6 + $0x5c] sm:$0xf]
    %v337 = vld [vmem:[#allocation6 + $0x60] sm:$0xf]
    %v338 = vld [vmem:[#allocation6 + $0x64] sm:$0xf]
    %v339 = vld [vmem:[#allocation6 + $0x68] sm:$0xf]
    %v340 = vld [vmem:[#allocation6 + $0x6c] sm:$0xf]
    %v341 = vld [vmem:[#allocation6 + $0x70] sm:$0xf]
    %v342 = vld [vmem:[#allocation6 + $0x74] sm:$0xf]
    %v343 = vld [vmem:[#allocation6 + $0x78] sm:$0xf]
    %v344 = vld [vmem:[#allocation6 + $0x7c] sm:$0xf]
    %v345 = vld [vmem:[#allocation8] sm:$0xf]
    %v346 = vld [vmem:[#allocation8 + $0x4] sm:$0xf]
    %v347 = vld [vmem:[#allocation8 + $0x8] sm:$0xf]
    %v348 = vld [vmem:[#allocation8 + $0xc] sm:$0xf]
    %v349 = vld [vmem:[#allocation8 + $0x10] sm:$0xf]
    %v350 = vld [vmem:[#allocation8 + $0x14] sm:$0xf]
    %v351 = vld [vmem:[#allocation8 + $0x18] sm:$0xf]
    %v352 = vld [vmem:[#allocation8 + $0x1c] sm:$0xf]
    %v353 = vld [vmem:[#allocation8 + $0x20] sm:$0xf]
    %v354 = vld [vmem:[#allocation8 + $0x24] sm:$0xf]
    %v355 = vld [vmem:[#allocation8 + $0x28] sm:$0xf]
    %v356 = vld [vmem:[#allocation8 + $0x2c] sm:$0xf]
    %v357 = vld [vmem:[#allocation8 + $0x30] sm:$0xf]
    %v358 = vld [vmem:[#allocation8 + $0x34] sm:$0xf]
    %v359 = vld [vmem:[#allocation8 + $0x38] sm:$0xf]
    %v360 = vld [vmem:[#allocation8 + $0x3c] sm:$0xf]
    %v361 = vld [vmem:[#allocation9] sm:$0xff]
    %v362 = vld [vmem:[#allocation9 + $0x8] sm:$0xff]
    %v363 = vld [vmem:[#allocation9 + $0x10] sm:$0xff]
    %v364 = vld [vmem:[#allocation9 + $0x18] sm:$0xff]
    %v365 = vld [vmem:[#allocation9 + $0x20] sm:$0xff]
    %v366 = vld [vmem:[#allocation9 + $0x28] sm:$0xff]
    %v367 = vld [vmem:[#allocation9 + $0x30] sm:$0xff]
    %v368 = vld [vmem:[#allocation9 + $0x38] sm:$0xff]
    %v369 = vld [vmem:[#allocation9 + $0x40] sm:$0xff]
    %v370 = vld [vmem:[#allocation9 + $0x48] sm:$0xff]
    %v371 = vld [vmem:[#allocation9 + $0x50] sm:$0xff]
    %v372 = vld [vmem:[#allocation9 + $0x58] sm:$0xff]
    %v373 = vld [vmem:[#allocation9 + $0x60] sm:$0xff]
    %v374 = vld [vmem:[#allocation9 + $0x68] sm:$0xff]
    %v375 = vld [vmem:[#allocation9 + $0x70] sm:$0xff]
    %v376 = vld [vmem:[#allocation9 + $0x78] sm:$0xff]
    %v377 = vld [vmem:[%s9] sm:$0x3]
    %378 = vset.pattern.permute.xlu0 0
    %379 = vperm.xlu0 %378, %v311
    %v380 = vpop.permute.xlu0 %379
    %381 = vset.pattern.permute.xlu0 0
    %382 = vperm.xlu0 %381, %v312
    %v383 = vpop.permute.xlu0 %382
    %vm384 = vcmp.eq.s32.totalorder %v148, %v380
    %vm385 = vcmp.eq.s32.totalorder %v149, %v380
    %vm386 = vcmp.eq.s32.totalorder %v148, %v383
    %vm387 = vcmp.eq.s32.totalorder %v149, %v383
    %v388 = vsel %vm384, 1, 0
    %v389 = vsel %vm385, 1, 0
    %v390 = vsel %vm386, 1, 0
    %v391 = vsel %vm387, 1, 0
    %v392 = vcvt.s32.f32 %v388
    %v393 = vcvt.s32.f32 %v389
    %v394 = vcvt.s32.f32 %v390
    %v395 = vcvt.s32.f32 %v391
    %v396 = vpack.c.bf16 %v394, %v392
    %v397 = vpack.c.bf16 %v395, %v393
    %v398 = vld [vmem:[%s4] sm:$0xff]
    %v399 = vld [vmem:[%s4 + $0x8] sm:$0xf]
    %v400 = vld [vmem:[%s4 + $0xc] sm:$0xff]
    %v401 = vld [vmem:[%s4 + $0x14] sm:$0xf]
    %v402 = vld [vmem:[#allocation5] sm:$0xf]
    %v403 = vld [vmem:[#allocation5 + $0x4] sm:$0xf]
    %v404 = vld [vmem:[#allocation5 + $0x8] sm:$0xf]
    %v405 = vld [vmem:[#allocation5 + $0xc] sm:$0xf]
    %v406 = vld [vmem:[#allocation5 + $0x10] sm:$0xf]
    %v407 = vld [vmem:[#allocation5 + $0x14] sm:$0xf]
    %v408 = vld [vmem:[#allocation5 + $0x18] sm:$0xf]
    %v409 = vld [vmem:[#allocation5 + $0x1c] sm:$0xf]
    %v410 = vld [vmem:[#allocation5 + $0x20] sm:$0xf]
    %v411 = vld [vmem:[#allocation5 + $0x24] sm:$0xf]
    %v412 = vld [vmem:[#allocation5 + $0x28] sm:$0xf]
    %v413 = vld [vmem:[#allocation5 + $0x2c] sm:$0xf]
    %v414 = vld [vmem:[#allocation5 + $0x30] sm:$0xf]
    %v415 = vld [vmem:[#allocation5 + $0x34] sm:$0xf]
    %v416 = vld [vmem:[#allocation5 + $0x38] sm:$0xf]
    %v417 = vld [vmem:[#allocation5 + $0x3c] sm:$0xf]
    %v418 = vld [vmem:[#allocation5 + $0x40] sm:$0xf]
    %v419 = vld [vmem:[#allocation5 + $0x44] sm:$0xf]
    %v420 = vld [vmem:[#allocation5 + $0x48] sm:$0xf]
    %v421 = vld [vmem:[#allocation5 + $0x4c] sm:$0xf]
    %v422 = vld [vmem:[#allocation5 + $0x50] sm:$0xf]
    %v423 = vld [vmem:[#allocation5 + $0x54] sm:$0xf]
    %v424 = vld [vmem:[#allocation5 + $0x58] sm:$0xf]
    %v425 = vld [vmem:[#allocation5 + $0x5c] sm:$0xf]
    %v426 = vld [vmem:[#allocation5 + $0x60] sm:$0xf]
    %v427 = vld [vmem:[#allocation5 + $0x64] sm:$0xf]
    %v428 = vld [vmem:[#allocation5 + $0x68] sm:$0xf]
    %v429 = vld [vmem:[#allocation5 + $0x6c] sm:$0xf]
    %v430 = vld [vmem:[#allocation5 + $0x70] sm:$0xf]
    %v431 = vld [vmem:[#allocation5 + $0x74] sm:$0xf]
    %v432 = vld [vmem:[#allocation5 + $0x78] sm:$0xf]
    %v433 = vld [vmem:[#allocation5 + $0x7c] sm:$0xf]
    %v434 = vld [vmem:[#allocation5 + $0x80] sm:$0xf]
    %v435 = vld [vmem:[#allocation5 + $0x84] sm:$0xf]
    %v436 = vld [vmem:[#allocation5 + $0x88] sm:$0xf]
    %v437 = vld [vmem:[#allocation5 + $0x8c] sm:$0xf]
    %v438 = vld [vmem:[#allocation5 + $0x90] sm:$0xf]
    %v439 = vld [vmem:[#allocation5 + $0x94] sm:$0xf]
    %v440 = vld [vmem:[#allocation5 + $0x98] sm:$0xf]
    %v441 = vld [vmem:[#allocation5 + $0x9c] sm:$0xf]
    %v442 = vld [vmem:[#allocation5 + $0xa0] sm:$0xf]
    %v443 = vld [vmem:[#allocation5 + $0xa4] sm:$0xf]
    %v444 = vld [vmem:[#allocation5 + $0xa8] sm:$0xf]
    %v445 = vld [vmem:[#allocation5 + $0xac] sm:$0xf]
    %v446 = vld [vmem:[#allocation5 + $0xb0] sm:$0xf]
    %v447 = vld [vmem:[#allocation5 + $0xb4] sm:$0xf]
    %v448 = vld [vmem:[#allocation5 + $0xb8] sm:$0xf]
    %v449 = vld [vmem:[#allocation5 + $0xbc] sm:$0xf]
    %v454 = vunpack.c.l.b16 %v398
    %v455 = vunpack.c.h.b16 %v398
    %v456 = vunpack.c.l.b16 %v399
    %v457 = vunpack.c.l.b16 %v400
    %v458 = vunpack.c.h.b16 %v400
    %v459 = vunpack.c.l.b16 %v401
    %v460 = vpack.c.b16 %v457, %v454
    %v461 = vpack.c.b16 %v458, %v455
    %v462 = vpack.c.b16 %v459, %v456
    %v514 = vunpack.c.l.b16 %v402
    %v515 = vunpack.c.l.b16 %v403
    %v516 = vunpack.c.l.b16 %v404
    %v517 = vunpack.c.l.b16 %v405
    %v518 = vunpack.c.l.b16 %v406
    %v519 = vunpack.c.l.b16 %v407
    %v520 = vunpack.c.l.b16 %v408
    %v521 = vunpack.c.l.b16 %v409
    %v522 = vunpack.c.l.b16 %v410
    %v523 = vunpack.c.l.b16 %v411
    %v524 = vunpack.c.l.b16 %v412
    %v525 = vunpack.c.l.b16 %v413
    %v526 = vunpack.c.l.b16 %v414
    %v527 = vunpack.c.l.b16 %v415
    %v528 = vunpack.c.l.b16 %v416
    %v529 = vunpack.c.l.b16 %v417
    %v530 = vunpack.c.l.b16 %v418
    %v531 = vunpack.c.l.b16 %v419
    %v532 = vunpack.c.l.b16 %v420
    %v533 = vunpack.c.l.b16 %v421
    %v534 = vunpack.c.l.b16 %v422
    %v535 = vunpack.c.l.b16 %v423
    %v536 = vunpack.c.l.b16 %v424
    %v537 = vunpack.c.l.b16 %v425
    %v538 = vunpack.c.l.b16 %v426
    %v539 = vunpack.c.l.b16 %v427
    %v540 = vunpack.c.l.b16 %v428
    %v541 = vunpack.c.l.b16 %v429
    %v542 = vunpack.c.l.b16 %v430
    %v543 = vunpack.c.l.b16 %v431
    %v544 = vunpack.c.l.b16 %v432
    %v545 = vunpack.c.l.b16 %v433
    %v546 = vunpack.c.l.b16 %v434
    %v547 = vunpack.c.l.b16 %v435
    %v548 = vunpack.c.l.b16 %v436
    %v549 = vunpack.c.l.b16 %v437
    %v550 = vunpack.c.l.b16 %v438
    %v551 = vunpack.c.l.b16 %v439
    %v552 = vunpack.c.l.b16 %v440
    %v553 = vunpack.c.l.b16 %v441
    %v554 = vunpack.c.l.b16 %v442
    %v555 = vunpack.c.l.b16 %v443
    %v556 = vunpack.c.l.b16 %v444
    %v557 = vunpack.c.l.b16 %v445
    %v558 = vunpack.c.l.b16 %v446
    %v559 = vunpack.c.l.b16 %v447
    %v560 = vunpack.c.l.b16 %v448
    %v561 = vunpack.c.l.b16 %v449
    %v562 = vpack.c.b16 %v515, %v514
    %v563 = vpack.c.b16 %v517, %v516
    %v564 = vpack.c.b16 %v519, %v518
    %v565 = vpack.c.b16 %v521, %v520
    %v566 = vpack.c.b16 %v523, %v522
    %v567 = vpack.c.b16 %v525, %v524
    %v568 = vpack.c.b16 %v527, %v526
    %v569 = vpack.c.b16 %v529, %v528
    %v570 = vpack.c.b16 %v531, %v530
    %v571 = vpack.c.b16 %v533, %v532
    %v572 = vpack.c.b16 %v535, %v534
    %v573 = vpack.c.b16 %v537, %v536
    %v574 = vpack.c.b16 %v539, %v538
    %v575 = vpack.c.b16 %v541, %v540
    %v576 = vpack.c.b16 %v543, %v542
    %v577 = vpack.c.b16 %v545, %v544
    %v578 = vpack.c.b16 %v547, %v546
    %v579 = vpack.c.b16 %v549, %v548
    %v580 = vpack.c.b16 %v551, %v550
    %v581 = vpack.c.b16 %v553, %v552
    %v582 = vpack.c.b16 %v555, %v554
    %v583 = vpack.c.b16 %v557, %v556
    %v584 = vpack.c.b16 %v559, %v558
    %v585 = vpack.c.b16 %v561, %v560
    %610 = vmatpush.bf16.msra.mxu0 %v569
    %611 = vmatpush.bf16.msra.mxu0 %v568
    %612 = vmatpush.bf16.msra.mxu0 %v567
    %613 = vmatpush.bf16.msra.mxu0 %v566
    %614 = vmatpush.bf16.msra.mxu0 %v565
    %615 = vmatpush.bf16.msra.mxu0 %v564
    %616 = vmatpush.bf16.msra.mxu0 %v563
    %617 = vmatpush.bf16.msra.mxu0 %v562
    %618 = vmatmul.bf16.gmra.mxu0 %v460
    %v619 = vpop.f32.mrf.mxu0
    %v620 = vadd.f32 0.0, %v619
    %v621 = vpop.f32.mrf.mxu0
    %v622 = vadd.f32 0.0, %v621
    %623 = vdwg.mxu0
    %624 = vmatpush.bf16.msra.mxu0 %v577
    %625 = vmatpush.bf16.msra.mxu0 %v576
    %626 = vmatpush.bf16.msra.mxu0 %v575
    %627 = vmatpush.bf16.msra.mxu0 %v574
    %628 = vmatpush.bf16.msra.mxu0 %v573
    %629 = vmatpush.bf16.msra.mxu0 %v572
    %630 = vmatpush.bf16.msra.mxu0 %v571
    %631 = vmatpush.bf16.msra.mxu0 %v570
    %632 = vmatmul.bf16.gmra.mxu0 %v461
    %v633 = vpop.f32.mrf.mxu0
    %v634 = vadd.f32 %v620, %v633
    %v635 = vpop.f32.mrf.mxu0
    %v636 = vadd.f32 %v622, %v635
    %637 = vdwg.mxu0
    %638 = vmatpush.bf16.msra.mxu0 %v585
    %639 = vmatpush.bf16.msra.mxu0 %v584
    %640 = vmatpush.bf16.msra.mxu0 %v583
    %641 = vmatpush.bf16.msra.mxu0 %v582
    %642 = vmatpush.bf16.msra.mxu0 %v581
    %643 = vmatpush.bf16.msra.mxu0 %v580
    %644 = vmatpush.bf16.msra.mxu0 %v579
    %645 = vmatpush.bf16.msra.mxu0 %v578
    %646 = vmatmul.bf16.gmra.mxu0 %v462
    %v647 = vpop.f32.mrf.mxu0
    %v648 = vadd.f32 %v634, %v647
    %v649 = vpop.f32.mrf.mxu0
    %v650 = vadd.f32 %v636, %v649
    %651 = vdwg.mxu0
    %v684 = vunpack.c.l.b16 %v313
    %v685 = vunpack.c.l.b16 %v314
    %v686 = vunpack.c.l.b16 %v315
    %v687 = vunpack.c.l.b16 %v316
    %v688 = vunpack.c.l.b16 %v317
    %v689 = vunpack.c.l.b16 %v318
    %v690 = vunpack.c.l.b16 %v319
    %v691 = vunpack.c.l.b16 %v320
    %v692 = vunpack.c.l.b16 %v321
    %v693 = vunpack.c.l.b16 %v322
    %v694 = vunpack.c.l.b16 %v323
    %v695 = vunpack.c.l.b16 %v324
    %v696 = vunpack.c.l.b16 %v325
    %v697 = vunpack.c.l.b16 %v326
    %v698 = vunpack.c.l.b16 %v327
    %v699 = vunpack.c.l.b16 %v328
    %v700 = vunpack.c.l.b16 %v329
    %v701 = vunpack.c.l.b16 %v330
    %v702 = vunpack.c.l.b16 %v331
    %v703 = vunpack.c.l.b16 %v332
    %v704 = vunpack.c.l.b16 %v333
    %v705 = vunpack.c.l.b16 %v334
    %v706 = vunpack.c.l.b16 %v335
    %v707 = vunpack.c.l.b16 %v336
    %v708 = vunpack.c.l.b16 %v337
    %v709 = vunpack.c.l.b16 %v338
    %v710 = vunpack.c.l.b16 %v339
    %v711 = vunpack.c.l.b16 %v340
    %v712 = vunpack.c.l.b16 %v341
    %v713 = vunpack.c.l.b16 %v342
    %v714 = vunpack.c.l.b16 %v343
    %v715 = vunpack.c.l.b16 %v344
    %v716 = vpack.c.b16 %v685, %v684
    %v717 = vpack.c.b16 %v687, %v686
    %v718 = vpack.c.b16 %v689, %v688
    %v719 = vpack.c.b16 %v691, %v690
    %v720 = vpack.c.b16 %v693, %v692
    %v721 = vpack.c.b16 %v695, %v694
    %v722 = vpack.c.b16 %v697, %v696
    %v723 = vpack.c.b16 %v699, %v698
    %v724 = vpack.c.b16 %v701, %v700
    %v725 = vpack.c.b16 %v703, %v702
    %v726 = vpack.c.b16 %v705, %v704
    %v727 = vpack.c.b16 %v707, %v706
    %v728 = vpack.c.b16 %v709, %v708
    %v729 = vpack.c.b16 %v711, %v710
    %v730 = vpack.c.b16 %v713, %v712
    %v731 = vpack.c.b16 %v715, %v714
    %748 = vmatpush.bf16.msra.mxu0 %v723
    %749 = vmatpush.bf16.msra.mxu0 %v722
    %750 = vmatpush.bf16.msra.mxu0 %v721
    %751 = vmatpush.bf16.msra.mxu0 %v720
    %752 = vmatpush.bf16.msra.mxu0 %v719
    %753 = vmatpush.bf16.msra.mxu0 %v718
    %754 = vmatpush.bf16.msra.mxu0 %v717
    %755 = vmatpush.bf16.msra.mxu0 %v716
    %756 = vmatmul.bf16.gmra.mxu0 %v396
    %v757 = vpop.f32.mrf.mxu0
    %v758 = vadd.f32 %v648, %v757
    %v759 = vpop.f32.mrf.mxu0
    %v760 = vadd.f32 %v650, %v759
    %761 = vdwg.mxu0
    %762 = vmatpush.bf16.msra.mxu0 %v731
    %763 = vmatpush.bf16.msra.mxu0 %v730
    %764 = vmatpush.bf16.msra.mxu0 %v729
    %765 = vmatpush.bf16.msra.mxu0 %v728
    %766 = vmatpush.bf16.msra.mxu0 %v727
    %767 = vmatpush.bf16.msra.mxu0 %v726
    %768 = vmatpush.bf16.msra.mxu0 %v725
    %769 = vmatpush.bf16.msra.mxu0 %v724
    %770 = vmatmul.bf16.gmra.mxu0 %v397
    %v771 = vpop.f32.mrf.mxu0
    %v772 = vadd.f32 %v758, %v771
    %v773 = vpop.f32.mrf.mxu0
    %v774 = vadd.f32 %v760, %v773
    %775 = vdwg.mxu0
    %v776 = vxor.u32 %v772, 2147483648
    %v777 = vxor.u32 %v774, 2147483648
    %v778 = vmul.f32 %v776, 1.442695
    %v779 = vpow.pop %v778
    %v780 = vmul.f32 %v777, 1.442695
    %v781 = vpow.pop %v780
    %v782 = vadd.f32 %v779, 1.0
    %v783 = vadd.f32 %v781, 1.0
    %v784 = vrcp.pop %v782
    %v785 = vmul.f32 %v782, %v784
    %v786 = vsub.f32 1.0, %v785
    %v787 = vmul.f32 %v784, %v786
    %v788 = vadd.f32 %v784, %v787
    %vm789 = vweird.f32 %v782
    %vm790 = vweird.f32 %v784
    %vm791 = vmor %vm789, %vm790
    %v792 = vsel %vm791, %v784, %v788
    %v793 = vand.u32 2147483647, %v782
    %vm794 = vcmp.eq.f32.partialorder %v793, 8.507059e+37
    %v795 = vand.u32 %v782, 2147483648
    %v796 = vor.u32 1.1754944e-38, %v795
    %v797 = vsel %vm794, %v796, %v792
    %v798 = vmul.f32 1.0, %v797
    %v799 = vrcp.pop %v783
    %v800 = vmul.f32 %v783, %v799
    %v801 = vsub.f32 1.0, %v800
    %v802 = vmul.f32 %v799, %v801
    %v803 = vadd.f32 %v799, %v802
    %vm804 = vweird.f32 %v783
    %vm805 = vweird.f32 %v799
    %vm806 = vmor %vm804, %vm805
    %v807 = vsel %vm806, %v799, %v803
    %v808 = vand.u32 2147483647, %v783
    %vm809 = vcmp.eq.f32.partialorder %v808, 8.507059e+37
    %v810 = vand.u32 %v783, 2147483648
    %v811 = vor.u32 1.1754944e-38, %v810
    %v812 = vsel %vm809, %v811, %v807
    %v813 = vmul.f32 1.0, %v812
    %v814 = vmul.f32 %v772, %v798
    %v815 = vmul.f32 %v774, %v813
    %v816 = vpack.c.bf16 %v815, %v814
    %vm817 = vcmask 130048
    %v819 = vsel %vm817, %v264, 0
    %821 = vmatpush.bf16.msra.mxu0 0
    %822 = vmatpush.bf16.msra.mxu0 0
    %823 = vmatpush.bf16.msra.mxu0 0
    %824 = vmatpush.bf16.msra.mxu0 0
    %825 = vmatpush.bf16.msra.mxu0 0
    %826 = vmatpush.bf16.msra.mxu0 0
    %827 = vmatpush.bf16.msra.mxu0 0
    %828 = vmatpush.bf16.msra.mxu0 %v816
    %829 = vmatmul.bf16.gmra.mxu0 %v819
    %v830 = vpop.f32.mrf.mxu0
    %v831 = vadd.f32 0.0, %v830
    %v832 = vpop.f32.mrf.mxu0
    %833 = vdwg.mxu0
    %v834 = vpack.c.bf16 %v831, %v831
    %v851 = vunpack.c.l.b16 %v361
    %v852 = vunpack.c.h.b16 %v361
    %v853 = vunpack.c.l.b16 %v362
    %v854 = vunpack.c.h.b16 %v362
    %v855 = vunpack.c.l.b16 %v363
    %v856 = vunpack.c.h.b16 %v363
    %v857 = vunpack.c.l.b16 %v364
    %v858 = vunpack.c.h.b16 %v364
    %v859 = vunpack.c.l.b16 %v365
    %v860 = vunpack.c.h.b16 %v365
    %v861 = vunpack.c.l.b16 %v366
    %v862 = vunpack.c.h.b16 %v366
    %v863 = vunpack.c.l.b16 %v367
    %v864 = vunpack.c.h.b16 %v367
    %v865 = vunpack.c.l.b16 %v368
    %v866 = vunpack.c.h.b16 %v368
    %v867 = vunpack.c.l.b16 %v369
    %v868 = vunpack.c.h.b16 %v369
    %v869 = vunpack.c.l.b16 %v370
    %v870 = vunpack.c.h.b16 %v370
    %v871 = vunpack.c.l.b16 %v371
    %v872 = vunpack.c.h.b16 %v371
    %v873 = vunpack.c.l.b16 %v372
    %v874 = vunpack.c.h.b16 %v372
    %v875 = vunpack.c.l.b16 %v373
    %v876 = vunpack.c.h.b16 %v373
    %v877 = vunpack.c.l.b16 %v374
    %v878 = vunpack.c.h.b16 %v374
    %v879 = vunpack.c.l.b16 %v375
    %v880 = vunpack.c.h.b16 %v375
    %v881 = vunpack.c.l.b16 %v376
    %v882 = vunpack.c.h.b16 %v376
    %v883 = vpack.c.b16 %v853, %v851
    %v884 = vpack.c.b16 %v854, %v852
    %v885 = vpack.c.b16 %v857, %v855
    %v886 = vpack.c.b16 %v858, %v856
    %v887 = vpack.c.b16 %v861, %v859
    %v888 = vpack.c.b16 %v862, %v860
    %v889 = vpack.c.b16 %v865, %v863
    %v890 = vpack.c.b16 %v866, %v864
    %v891 = vpack.c.b16 %v869, %v867
    %v892 = vpack.c.b16 %v870, %v868
    %v893 = vpack.c.b16 %v873, %v871
    %v894 = vpack.c.b16 %v874, %v872
    %v895 = vpack.c.b16 %v877, %v875
    %v896 = vpack.c.b16 %v878, %v876
    %v897 = vpack.c.b16 %v881, %v879
    %v898 = vpack.c.b16 %v882, %v880
    %915 = vmatpush.bf16.msra.mxu0 %v897
    %916 = vmatpush.bf16.msra.mxu0 %v895
    %917 = vmatpush.bf16.msra.mxu0 %v893
    %918 = vmatpush.bf16.msra.mxu0 %v891
    %919 = vmatpush.bf16.msra.mxu0 %v889
    %920 = vmatpush.bf16.msra.mxu0 %v887
    %921 = vmatpush.bf16.msra.mxu0 %v885
    %922 = vmatpush.bf16.msra.mxu0 %v883
    %923 = vmatmul.bf16.gmra.mxu0 %v834
    %v924 = vpop.f32.mrf.mxu0
    %v925 = vadd.f32 0.0, %v924
    %v926 = vpop.f32.mrf.mxu0
    %927 = vdwg.mxu0
    %928 = vmatpush.bf16.msra.mxu0 %v898
    %929 = vmatpush.bf16.msra.mxu0 %v896
    %930 = vmatpush.bf16.msra.mxu0 %v894
    %931 = vmatpush.bf16.msra.mxu0 %v892
    %932 = vmatpush.bf16.msra.mxu0 %v890
    %933 = vmatpush.bf16.msra.mxu0 %v888
    %934 = vmatpush.bf16.msra.mxu0 %v886
    %935 = vmatpush.bf16.msra.mxu0 %v884
    %936 = vmatmul.bf16.gmra.mxu0 %v834
    %v937 = vpop.f32.mrf.mxu0
    %v938 = vadd.f32 0.0, %v937
    %v939 = vpop.f32.mrf.mxu0
    %940 = vdwg.mxu0
    %vm941 = vcmask 1043456
    %v942 = vsel %vm941, %v925, -inf
    %v943 = vsel %vm941, %v938, -inf
    %v944 = vmax.f32 %v942, %v943
    %945 = vmax.xlane.f32.xlu0 %v944
    %v946 = vpop.xlane.xlu0 %945
    %vm947 = vcmp.eq.f32.partialorder %v925, %v946
    %vm948 = vcmp.eq.f32.partialorder %v938, %v946
    %v949 = vsel %vm947, %v150, 256.0
    %v950 = vsel %vm948, %v151, 256.0
    %v951 = vsel %vm941, %v949, inf
    %v952 = vsel %vm941, %v950, inf
    %v953 = vmin.f32 %v951, %v952
    %954 = vmin.xlane.f32.xlu0 %v953
    %v955 = vpop.xlane.xlu0 %954
    %v956 = vcvt.f32.s32.to.zero.pseudo %v955
    %vm957 = vcmp.eq.s32.totalorder %v148, %v956
    %vm958 = vcmp.eq.s32.totalorder %v149, %v956
    %v959 = vperm.slane %v377, 0
    %v960 = vperm.slane %v377, 1
    %v961 = vsel %vm957, %v959, 0
    %v962 = vsel %vm958, %v960, 0
    %v963 = vsel %vm941, %v961, 0
    %v964 = vsel %vm941, %v962, 0
    %v965 = vadd.s32 %v963, %v964
    %v966 = vand.u32 %v965, 65535
    %v967 = vshrl.u32 %v965, 16
    %v968 = vcvt.s32.f32 %v966
    %v969 = vcvt.s32.f32 %v967
    %970 = vadd.xlane.f32.xlu0 %v968
    %v971 = vpop.xlane.xlu0 %970
    %972 = vadd.xlane.f32.xlu0 %v969
    %v973 = vpop.xlane.xlu0 %972
    %v974 = vcvt.f32.s32 %v971
    %v975 = vcvt.f32.s32 %v973
    %v976 = vshll.u32 %v975, 16
    %v977 = vadd.s32 %v976, %v974
    %v978 = vadd.s32 %v956, %v977
    %vm979 = vcmp.eq.s32.totalorder %v148, %v978
    %vm980 = vcmp.eq.s32.totalorder %v149, %v978
    %v981 = vsel %vm979, 1, 0
    %v982 = vsel %vm980, 1, 0
    %v983 = vcvt.s32.f32 %v981
    %v984 = vcvt.s32.f32 %v982
    %v985 = vpack.c.bf16 %v983, %v983
    %v986 = vpack.c.bf16 %v984, %v984
    %v1003 = vunpack.c.l.b16 %v345
    %v1004 = vunpack.c.l.b16 %v346
    %v1005 = vunpack.c.l.b16 %v347
    %v1006 = vunpack.c.l.b16 %v348
    %v1007 = vunpack.c.l.b16 %v349
    %v1008 = vunpack.c.l.b16 %v350
    %v1009 = vunpack.c.l.b16 %v351
    %v1010 = vunpack.c.l.b16 %v352
    %v1011 = vunpack.c.l.b16 %v353
    %v1012 = vunpack.c.l.b16 %v354
    %v1013 = vunpack.c.l.b16 %v355
    %v1014 = vunpack.c.l.b16 %v356
    %v1015 = vunpack.c.l.b16 %v357
    %v1016 = vunpack.c.l.b16 %v358
    %v1017 = vunpack.c.l.b16 %v359
    %v1018 = vunpack.c.l.b16 %v360
    %v1019 = vpack.c.b16 %v1004, %v1003
    %v1020 = vpack.c.b16 %v1006, %v1005
    %v1021 = vpack.c.b16 %v1008, %v1007
    %v1022 = vpack.c.b16 %v1010, %v1009
    %v1023 = vpack.c.b16 %v1012, %v1011
    %v1024 = vpack.c.b16 %v1014, %v1013
    %v1025 = vpack.c.b16 %v1016, %v1015
    %v1026 = vpack.c.b16 %v1018, %v1017
    %1035 = vmatpush.bf16.msra.mxu0 %v1026
    %1036 = vmatpush.bf16.msra.mxu0 %v1025
    %1037 = vmatpush.bf16.msra.mxu0 %v1024
    %1038 = vmatpush.bf16.msra.mxu0 %v1023
    %1039 = vmatpush.bf16.msra.mxu0 %v1022
    %1040 = vmatpush.bf16.msra.mxu0 %v1021
    %1041 = vmatpush.bf16.msra.mxu0 %v1020
    %1042 = vmatpush.bf16.msra.mxu0 %v1019
    %1043 = vmatmul.bf16.gmra.mxu0 %v834
    %v1044 = vpop.f32.mrf.mxu0
    %v1045 = vadd.f32 0.0, %v1044
    %v1046 = vpop.f32.mrf.mxu0
    %1047 = vdwg.mxu0
    %1048 = vmatpush.bf16.msra.mxu0 %v723
    %1049 = vmatpush.bf16.msra.mxu0 %v722
    %1050 = vmatpush.bf16.msra.mxu0 %v721
    %1051 = vmatpush.bf16.msra.mxu0 %v720
    %1052 = vmatpush.bf16.msra.mxu0 %v719
    %1053 = vmatpush.bf16.msra.mxu0 %v718
    %1054 = vmatpush.bf16.msra.mxu0 %v717
    %1055 = vmatpush.bf16.msra.mxu0 %v716
    %1056 = vmatmul.bf16.gmra.mxu0 %v985
    %v1057 = vpop.f32.mrf.mxu0
    %v1058 = vadd.f32 %v1045, %v1057
    %v1059 = vpop.f32.mrf.mxu0
    %1060 = vdwg.mxu0
    %1061 = vmatpush.bf16.msra.mxu0 %v731
    %1062 = vmatpush.bf16.msra.mxu0 %v730
    %1063 = vmatpush.bf16.msra.mxu0 %v729
    %1064 = vmatpush.bf16.msra.mxu0 %v728
    %1065 = vmatpush.bf16.msra.mxu0 %v727
    %1066 = vmatpush.bf16.msra.mxu0 %v726
    %1067 = vmatpush.bf16.msra.mxu0 %v725
    %1068 = vmatpush.bf16.msra.mxu0 %v724
    %1069 = vmatmul.bf16.gmra.mxu0 %v986
    %v1070 = vpop.f32.mrf.mxu0
    %v1071 = vadd.f32 %v1058, %v1070
    %v1072 = vpop.f32.mrf.mxu0
    %1073 = vdwg.mxu0
    %v1074 = vxor.u32 %v1071, 2147483648
    %v1075 = vmul.f32 %v1074, 1.442695
    %v1076 = vpow.pop %v1075
    %v1077 = vadd.f32 %v1076, 1.0
    %v1078 = vrcp.pop %v1077
    %v1079 = vmul.f32 %v1077, %v1078
    %v1080 = vsub.f32 1.0, %v1079
    %v1081 = vmul.f32 %v1078, %v1080
    %v1082 = vadd.f32 %v1078, %v1081
    %vm1083 = vweird.f32 %v1077
    %vm1084 = vweird.f32 %v1078
    %vm1085 = vmor %vm1083, %vm1084
    %v1086 = vsel %vm1085, %v1078, %v1082
    %v1087 = vand.u32 2147483647, %v1077
    %vm1088 = vcmp.eq.f32.partialorder %v1087, 8.507059e+37
    %v1089 = vand.u32 %v1077, 2147483648
    %v1090 = vor.u32 1.1754944e-38, %v1089
    %v1091 = vsel %vm1088, %v1090, %v1086
    %v1092 = vmul.f32 1.0, %v1091
    %v1093 = vmul.f32 %v1071, %v1092
    %v1094 = vpack.c.bf16 %v1093, %v1093
    %1095 = vmatpush.bf16.msra.mxu0 %v897
    %1096 = vmatpush.bf16.msra.mxu0 %v895
    %1097 = vmatpush.bf16.msra.mxu0 %v893
    %1098 = vmatpush.bf16.msra.mxu0 %v891
    %1099 = vmatpush.bf16.msra.mxu0 %v889
    %1100 = vmatpush.bf16.msra.mxu0 %v887
    %1101 = vmatpush.bf16.msra.mxu0 %v885
    %1102 = vmatpush.bf16.msra.mxu0 %v883
    %1103 = vmatmul.bf16.gmra.mxu0 %v1094
    %v1104 = vpop.f32.mrf.mxu0
    %v1105 = vadd.f32 0.0, %v1104
    %v1106 = vpop.f32.mrf.mxu0
    %1107 = vdwg.mxu0
    %1108 = vmatpush.bf16.msra.mxu0 %v898
    %1109 = vmatpush.bf16.msra.mxu0 %v896
    %1110 = vmatpush.bf16.msra.mxu0 %v894
    %1111 = vmatpush.bf16.msra.mxu0 %v892
    %1112 = vmatpush.bf16.msra.mxu0 %v890
    %1113 = vmatpush.bf16.msra.mxu0 %v888
    %1114 = vmatpush.bf16.msra.mxu0 %v886
    %1115 = vmatpush.bf16.msra.mxu0 %v884
    %1116 = vmatmul.bf16.gmra.mxu0 %v1094
    %v1117 = vpop.f32.mrf.mxu0
    %v1118 = vadd.f32 0.0, %v1117
    %v1119 = vpop.f32.mrf.mxu0
    %1120 = vdwg.mxu0
    %v1121 = vsel %vm941, %v1105, -inf
    %v1122 = vsel %vm941, %v1118, -inf
    %v1123 = vmax.f32 %v1121, %v1122
    %1124 = vmax.xlane.f32.xlu0 %v1123
    %v1125 = vpop.xlane.xlu0 %1124
    %vm1126 = vcmp.eq.f32.partialorder %v1105, %v1125
    %vm1127 = vcmp.eq.f32.partialorder %v1118, %v1125
    %v1128 = vsel %vm1126, %v150, 256.0
    %v1129 = vsel %vm1127, %v151, 256.0
    %v1130 = vsel %vm941, %v1128, inf
    %v1131 = vsel %vm941, %v1129, inf
    %v1132 = vmin.f32 %v1130, %v1131
    %1133 = vmin.xlane.f32.xlu0 %v1132
    %v1134 = vpop.xlane.xlu0 %1133
    %v1135 = vcvt.f32.s32.to.zero.pseudo %v1134
    %vm1136 = vcmp.eq.s32.totalorder %v148, %v1135
    %vm1137 = vcmp.eq.s32.totalorder %v149, %v1135
    %v1138 = vsel %vm1136, %v959, 0
    %v1139 = vsel %vm1137, %v960, 0
    %v1140 = vsel %vm941, %v1138, 0
    %v1141 = vsel %vm941, %v1139, 0
    %v1142 = vadd.s32 %v1140, %v1141
    %v1143 = vand.u32 %v1142, 65535
    %v1144 = vshrl.u32 %v1142, 16
    %v1145 = vcvt.s32.f32 %v1143
    %v1146 = vcvt.s32.f32 %v1144
    %1147 = vadd.xlane.f32.xlu0 %v1145
    %v1148 = vpop.xlane.xlu0 %1147
    %1149 = vadd.xlane.f32.xlu0 %v1146
    %v1150 = vpop.xlane.xlu0 %1149
    %v1151 = vcvt.f32.s32 %v1148
    %v1152 = vcvt.f32.s32 %v1150
    %v1153 = vshll.u32 %v1152, 16
    %v1154 = vadd.s32 %v1153, %v1151
    %v1155 = vadd.s32 %v1135, %v1154
    %vm1156 = vcmp.eq.s32.totalorder %v148, %v1155
    %vm1157 = vcmp.eq.s32.totalorder %v149, %v1155
    %v1158 = vsel %vm1156, 1, 0
    %v1159 = vsel %vm1157, 1, 0
    %v1160 = vcvt.s32.f32 %v1158
    %v1161 = vcvt.s32.f32 %v1159
    %v1162 = vpack.c.bf16 %v1160, %v1160
    %v1163 = vpack.c.bf16 %v1161, %v1161
    %1164 = vmatpush.bf16.msra.mxu0 %v1026
    %1165 = vmatpush.bf16.msra.mxu0 %v1025
    %1166 = vmatpush.bf16.msra.mxu0 %v1024
    %1167 = vmatpush.bf16.msra.mxu0 %v1023
    %1168 = vmatpush.bf16.msra.mxu0 %v1022
    %1169 = vmatpush.bf16.msra.mxu0 %v1021
    %1170 = vmatpush.bf16.msra.mxu0 %v1020
    %1171 = vmatpush.bf16.msra.mxu0 %v1019
    %1172 = vmatmul.bf16.gmra.mxu0 %v1094
    %v1173 = vpop.f32.mrf.mxu0
    %v1174 = vadd.f32 0.0, %v1173
    %v1175 = vpop.f32.mrf.mxu0
    %1176 = vdwg.mxu0
    %1177 = vmatpush.bf16.msra.mxu0 %v723
    %1178 = vmatpush.bf16.msra.mxu0 %v722
    %1179 = vmatpush.bf16.msra.mxu0 %v721
    %1180 = vmatpush.bf16.msra.mxu0 %v720
    %1181 = vmatpush.bf16.msra.mxu0 %v719
    %1182 = vmatpush.bf16.msra.mxu0 %v718
    %1183 = vmatpush.bf16.msra.mxu0 %v717
    %1184 = vmatpush.bf16.msra.mxu0 %v716
    %1185 = vmatmul.bf16.gmra.mxu0 %v1162
    %v1186 = vpop.f32.mrf.mxu0
    %v1187 = vadd.f32 %v1174, %v1186
    %v1188 = vpop.f32.mrf.mxu0
    %1189 = vdwg.mxu0
    %1190 = vmatpush.bf16.msra.mxu0 %v731
    %1191 = vmatpush.bf16.msra.mxu0 %v730
    %1192 = vmatpush.bf16.msra.mxu0 %v729
    %1193 = vmatpush.bf16.msra.mxu0 %v728
    %1194 = vmatpush.bf16.msra.mxu0 %v727
    %1195 = vmatpush.bf16.msra.mxu0 %v726
    %1196 = vmatpush.bf16.msra.mxu0 %v725
    %1197 = vmatpush.bf16.msra.mxu0 %v724
    %1198 = vmatmul.bf16.gmra.mxu0 %v1163
    %v1199 = vpop.f32.mrf.mxu0
    %v1200 = vadd.f32 %v1187, %v1199
    %v1201 = vpop.f32.mrf.mxu0
    %1202 = vdwg.mxu0
    %v1203 = vxor.u32 %v1200, 2147483648
    %v1204 = vmul.f32 %v1203, 1.442695
    %v1205 = vpow.pop %v1204
    %v1206 = vadd.f32 %v1205, 1.0
    %v1207 = vrcp.pop %v1206
    %v1208 = vmul.f32 %v1206, %v1207
    %v1209 = vsub.f32 1.0, %v1208
    %v1210 = vmul.f32 %v1207, %v1209
    %v1211 = vadd.f32 %v1207, %v1210
    %vm1212 = vweird.f32 %v1206
    %vm1213 = vweird.f32 %v1207
    %vm1214 = vmor %vm1212, %vm1213
    %v1215 = vsel %vm1214, %v1207, %v1211
    %v1216 = vand.u32 2147483647, %v1206
    %vm1217 = vcmp.eq.f32.partialorder %v1216, 8.507059e+37
    %v1218 = vand.u32 %v1206, 2147483648
    %v1219 = vor.u32 1.1754944e-38, %v1218
    %v1220 = vsel %vm1217, %v1219, %v1215
    %v1221 = vmul.f32 1.0, %v1220
    %v1222 = vmul.f32 %v1200, %v1221
    %v1223 = vpack.c.bf16 %v1222, %v1222
    %1224 = vmatpush.bf16.msra.mxu0 %v897
    %1225 = vmatpush.bf16.msra.mxu0 %v895
    %1226 = vmatpush.bf16.msra.mxu0 %v893
    %1227 = vmatpush.bf16.msra.mxu0 %v891
    %1228 = vmatpush.bf16.msra.mxu0 %v889
    %1229 = vmatpush.bf16.msra.mxu0 %v887
    %1230 = vmatpush.bf16.msra.mxu0 %v885
    %1231 = vmatpush.bf16.msra.mxu0 %v883
    %1232 = vmatmul.bf16.gmra.mxu0 %v1223
    %v1233 = vpop.f32.mrf.mxu0
    %v1234 = vadd.f32 0.0, %v1233
    %v1235 = vpop.f32.mrf.mxu0
    %1236 = vdwg.mxu0
    %1237 = vmatpush.bf16.msra.mxu0 %v898
    %1238 = vmatpush.bf16.msra.mxu0 %v896
    %1239 = vmatpush.bf16.msra.mxu0 %v894
    %1240 = vmatpush.bf16.msra.mxu0 %v892
    %1241 = vmatpush.bf16.msra.mxu0 %v890
    %1242 = vmatpush.bf16.msra.mxu0 %v888
    %1243 = vmatpush.bf16.msra.mxu0 %v886
    %1244 = vmatpush.bf16.msra.mxu0 %v884
    %1245 = vmatmul.bf16.gmra.mxu0 %v1223
    %v1246 = vpop.f32.mrf.mxu0
    %v1247 = vadd.f32 0.0, %v1246
    %v1248 = vpop.f32.mrf.mxu0
    %1249 = vdwg.mxu0
    %v1250 = vsel %vm941, %v1234, -inf
    %v1251 = vsel %vm941, %v1247, -inf
    %v1252 = vmax.f32 %v1250, %v1251
    %1253 = vmax.xlane.f32.xlu0 %v1252
    %v1254 = vpop.xlane.xlu0 %1253
    %vm1255 = vcmp.eq.f32.partialorder %v1234, %v1254
    %vm1256 = vcmp.eq.f32.partialorder %v1247, %v1254
    %v1257 = vsel %vm1255, %v150, 256.0
    %v1258 = vsel %vm1256, %v151, 256.0
    %v1259 = vsel %vm941, %v1257, inf
    %v1260 = vsel %vm941, %v1258, inf
    %v1261 = vmin.f32 %v1259, %v1260
    %1262 = vmin.xlane.f32.xlu0 %v1261
    %v1263 = vpop.xlane.xlu0 %1262
    %v1264 = vcvt.f32.s32.to.zero.pseudo %v1263
    %vm1265 = vcmp.eq.s32.totalorder %v148, %v1264
    %vm1266 = vcmp.eq.s32.totalorder %v149, %v1264
    %v1267 = vsel %vm1265, %v959, 0
    %v1268 = vsel %vm1266, %v960, 0
    %v1269 = vsel %vm941, %v1267, 0
    %v1270 = vsel %vm941, %v1268, 0
    %v1271 = vadd.s32 %v1269, %v1270
    %v1272 = vand.u32 %v1271, 65535
    %v1273 = vshrl.u32 %v1271, 16
    %v1274 = vcvt.s32.f32 %v1272
    %v1275 = vcvt.s32.f32 %v1273
    %1276 = vadd.xlane.f32.xlu0 %v1274
    %v1277 = vpop.xlane.xlu0 %1276
    %1278 = vadd.xlane.f32.xlu0 %v1275
    %v1279 = vpop.xlane.xlu0 %1278
    %v1280 = vcvt.f32.s32 %v1277
    %v1281 = vcvt.f32.s32 %v1279
    %v1282 = vshll.u32 %v1281, 16
    %v1283 = vadd.s32 %v1282, %v1280
    %v1284 = vadd.s32 %v1264, %v1283
    %v1285 = vsel %vm277, %v978, 0
    %v1286 = vsel %vm284, %v1155, %v1285
    %vm1287 = vcmp.eq.s32.totalorder %v148, 2
    %v1288 = vsel %vm1287, %v1284, %v1286
    %vm1289 = vcmask 19456
    %1290 = vst.msk [vmem:[%s14] sm:$0xf] %vm1289, %v1288
    // Predicated region
    $region78: #{forward.1} parent=1 // pred_check
      _
    $region79: #{forward.1} parent=1 // pred_check_branch
      %1292 = sbr.rel (0) target = $region81
    $region80: #{forward.1} parent=1 // pred_region
      _
    $region81: #{forward.1} parent=1 // pred_fallthru
      _
    // Predicated region
    $region82: #{forward.1} parent=1 // pred_check
      _
    $region83: #{forward.1} parent=1 // pred_check_branch
      %1294 = sbr.rel (0) target = $region85
    $region84: #{forward.1} parent=1 // pred_region
      _
    $region85: #{forward.1} parent=1 // pred_fallthru
      _
    // Predicated region
    $region86: #{forward.1} parent=1 // pred_check
      _
    $region87: #{forward.1} parent=1 // pred_check_branch
      %1296 = sbr.rel (0) target = $region89
    $region88: #{forward.1} parent=1 // pred_region
      _
    $region89: #{forward.1} parent=1 // pred_fallthru
      _
    // Predicated region
    $region90: #{forward.1} parent=1 // pred_check
      _
    $region91: #{forward.1} parent=1 // pred_check_branch
      %1298 = sbr.rel (0) target = $region93
    $region92: #{forward.1} parent=1 // pred_region
      _
    $region93: #{forward.1} parent=1 // pred_fallthru
      _
    %1299 = vsyncpa [#allocation3], 1
    %1300 = vsyncpa [#allocation7], 1
    %1301 = vsyncpa [#allocation10], 1
    %1302 = vsyncpa [#allocation4], 1

</llo_original>
